<compile_context>
chip_gen: v5e
topology: v5e:2x2
jax: 0.10.0
libtpu: 0.0.40
codegen_flags: <defaults>
</compile_context>

<pallas_src>
import math

import jax
import jax.numpy as jnp
from jax import lax
from jax.experimental import pallas as pl
from jax.experimental.pallas import tpu as pltpu

# args.gama comes from argparse in the original script; fixed deterministically here.
GAMA = 0.1

_PAIR_WEIGHTS = (1.0, 1.0, 1.0, 2.0)  # sloss_sum1 + sloss_sum2 + sloss_sum3 + 2*sloss_sum4


def _coteach_kernel(labels_ref, l1, l2, l3, l4, l5, l6, l7, l8, out_ref):
    """labels_ref: (TB, 1) int32.  l*: (TB, C) logits (native dtype).

    Writes out_ref: (TB, 2) f32 -- column 0 = per-sample sloss_sum,
    column 1 = per-sample hloss (H).
    """
    logit_refs = (l1, l2, l3, l4, l5, l6, l7, l8)
    TB, C = logit_refs[0].shape

    labels = labels_ref[...]                                             # (TB, 1) int32
    onehot_mask = lax.broadcasted_iota(jnp.int32, (TB, C), 1) == labels  # (TB, C) bool

    # Per-row accumulators only; all full-width work is reduced per pair.
    sloss = jnp.zeros((TB, 1), jnp.float32)
    hloss = jnp.zeros((TB, 1), jnp.float32)

    def softmax_parts(x):
        # One exp per element; reuse it for both log-softmax and softmax.
        m = jnp.max(x, axis=-1, keepdims=True)
        z = x - m
        e = jnp.exp(z)
        s = jnp.sum(e, axis=-1, keepdims=True)
        lp = z - jnp.log(s)                                # log_softmax
        prob = e * pl.reciprocal(s, approx=False)          # softmax (exact division)
        return lp, prob

    def row_sum(v):
        return jnp.sum(v, axis=-1, keepdims=True)          # (TB, 1), XLU reduction

    for p in range(4):  # static unroll over the 4 logit pairs
        x1 = logit_refs[2 * p][...].astype(jnp.float32)
        x2 = logit_refs[2 * p + 1][...].astype(jnp.float32)

        lp1, p1 = softmax_parts(x1)
        lp2, p2 = softmax_parts(x2)

        # NOTE: keep the 1e-7 epsilon -- it clamps log near zero probabilities
        # exactly like the PyTorch code; do NOT replace nl with -lp.
        nl1 = -jnp.log(p1 + 1e-7)
        nl2 = -jnp.log(p2 + 1e-7)

        # Reduce each term to a per-row (TB, 1) value immediately (XLU slot has
        # slack); all weighting happens on rows, never on (TB, C) arrays.
        ce = row_sum(jnp.where(onehot_mask, lp1 + lp2, 0.0))   # = lp1[label] + lp2[label]
        rce = row_sum(nl1 * p2) + row_sum(nl2 * p1)
        h = row_sum(nl1 * p1) + row_sum(nl2 * p2)

        w = _PAIR_WEIGHTS[p]
        # F.cross_entropy(..., reduction='none') == -log_softmax[label]:
        #   0.9*w*(ce1+ce2) + 0.1*w*RCE  ==  (-0.9*w)*ce + (0.1*w)*rce
        sloss = sloss + ((-0.9 * w) * ce + (0.1 * w) * rce)
        hloss = hloss + w * h

    # Single dense store of both per-sample outputs.
    out_ref[...] = jnp.concatenate([sloss, hloss], axis=-1)


def _choose_batch_tile(B):
    """Fixed large tile (<=256 for v5e VMEM), but guarantee >=2 grid steps
    when possible so the 'parallel' axis shards across v7x's two TCs."""
    TB = 256
    if B < 2 * TB:
        half = -(-B // 2)                      # ceil(B / 2)
        TB = max(8, ((half + 7) // 8) * 8)     # round up to a multiple of 8
    return TB


def _per_sample_losses(logits_list, labels2d):
    """Runs the Pallas kernel; returns (sloss_sum[B], hloss[B])."""
    B, C = logits_list[0].shape
    TB = _choose_batch_tile(B)
    grid = (pl.cdiv(B, TB),)   # ragged tail block is masked by Pallas

    logit_spec = pl.BlockSpec((TB, C), lambda i: (i, 0))
    label_spec = pl.BlockSpec((TB, 1), lambda i: (i, 0))
    out_spec = pl.BlockSpec((TB, 2), lambda i: (i, 0))

    out = pl.pallas_call(
        _coteach_kernel,
        out_shape=jax.ShapeDtypeStruct((B, 2), jnp.float32),
        grid=grid,
        in_specs=[label_spec] + [logit_spec] * 8,
        out_specs=out_spec,
        compiler_params=pltpu.CompilerParams(
            dimension_semantics=("parallel",)),
    )(labels2d, *logits_list)
    return out[:, 0], out[:, 1]


def coteach_loss(logits_list, labels, epoch, *, Tepoch=10, drop_rate=0.25, gama=GAMA):
    """JAX/Pallas equivalent of CoteachLoss.forward.

    logits_list: list of 8 arrays, each (B, C).  Pass bf16 if the upstream
    model produces bf16 -- the kernel upcasts to f32 in VMEM, and bf16 halves
    HBM traffic on v5e/v6e where this kernel is bandwidth-bound.
    labels: (B,) integer class indices.
    epoch: python int (static).
    """
    assert len(logits_list) == 8
    B, C = logits_list[0].shape

    labels2d = labels.astype(jnp.int32).reshape(B, 1)
    sloss_sum, hloss = _per_sample_losses(list(logits_list), labels2d)

    forget_rate = min(epoch, Tepoch) / Tepoch * drop_rate
    num_remember = math.ceil((1.0 - forget_rate) * B)

    # TODO(synk): argsort/top-k selection + final scalar means stay in plain JAX (O(B) glue).
    ind_sorted = jnp.argsort(sloss_sum)
    ind_update = ind_sorted[:num_remember]
    return sloss_sum[ind_update].mean() - gama * hloss.mean()


if __name__ == "__main__":
    key = jax.random.PRNGKey(0)
    B = 12          # batch (not a multiple of the tile -> exercises masked tail + 2 grid steps)
    C = 32          # class_num (small synthetic value instead of 200)
    epoch = 5
    Tepoch = 10
    drop_rate = 0.25

    keys = jax.random.split(key, 9)
    logits_list = [jax.random.normal(keys[i], (B, C), dtype=jnp.float32) for i in range(8)]
    labels = jax.random.randint(keys[8], (B,), 0, C, dtype=jnp.int32)

    loss = coteach_loss(logits_list, labels, epoch, Tepoch=Tepoch, drop_rate=drop_rate)
    loss = jax.block_until_ready(loss)

    # Pure-JAX reference check of the full forward pass.
    def ref_pair(l1, l2, onehot):
        lp1 = jax.nn.log_softmax(l1, axis=-1)
        lp2 = jax.nn.log_softmax(l2, axis=-1)
        p1, p2 = jnp.exp(lp1), jnp.exp(lp2)
        ce1 = -jnp.sum(onehot * lp1, axis=-1)
        ce2 = -jnp.sum(onehot * lp2, axis=-1)
        nl1, nl2 = -jnp.log(p1 + 1e-7), -jnp.log(p2 + 1e-7)
        rce = jnp.sum(nl1 * p2, axis=-1) + jnp.sum(nl2 * p1, axis=-1)
        h = jnp.sum(nl1 * p1, axis=-1) + jnp.sum(nl2 * p2, axis=-1)
        return 0.9 * ce1 + 0.9 * ce2 + 0.1 * rce, h

    onehot = jax.nn.one_hot(labels, C, dtype=jnp.float32)
    sref = jnp.zeros((B,), jnp.float32)
    href = jnp.zeros((B,), jnp.float32)
    for pidx, w in enumerate(_PAIR_WEIGHTS):
        s, h = ref_pair(logits_list[2 * pidx], logits_list[2 * pidx + 1], onehot)
        sref = sref + w * s
        href = href + w * h
    forget_rate = min(epoch, Tepoch) / Tepoch * drop_rate
    num_remember = math.ceil((1.0 - forget_rate) * B)
    loss_ref = jnp.sort(sref)[:num_remember].mean() - GAMA * href.mean()

    assert jnp.allclose(loss, loss_ref, atol=1e-4, rtol=1e-4), (loss, loss_ref)
    print("KERNEL_OK")
</pallas_src>

<mosaic_0001>
module attributes {stable_mosaic.version = 11 : i64} {
  func.func @_coteach_kernel(%arg0: i32, %arg1: memref<8x1xi32, #tpu.memory_space<vmem>>, %arg2: memref<8x32xf32, #tpu.memory_space<vmem>>, %arg3: memref<8x32xf32, #tpu.memory_space<vmem>>, %arg4: memref<8x32xf32, #tpu.memory_space<vmem>>, %arg5: memref<8x32xf32, #tpu.memory_space<vmem>>, %arg6: memref<8x32xf32, #tpu.memory_space<vmem>>, %arg7: memref<8x32xf32, #tpu.memory_space<vmem>>, %arg8: memref<8x32xf32, #tpu.memory_space<vmem>>, %arg9: memref<8x32xf32, #tpu.memory_space<vmem>>, %arg10: memref<8x2xf32, #tpu.memory_space<vmem>>) attributes {dimension_semantics = [#tpu.dimension_semantics<parallel>], iteration_bounds = array<i64: 2>, scalar_prefetch = 0 : i64, scratch_operands = 0 : i64, tpu.core_type = #tpu.core_type<tc>, window_params = [{transform_indices = @transform_0, window_bounds = array<i64: 8, 1>}, {transform_indices = @transform_1, window_bounds = array<i64: 8, 32>}, {transform_indices = @transform_2, window_bounds = array<i64: 8, 32>}, {transform_indices = @transform_3, window_bounds = array<i64: 8, 32>}, {transform_indices = @transform_4, window_bounds = array<i64: 8, 32>}, {transform_indices = @transform_5, window_bounds = array<i64: 8, 32>}, {transform_indices = @transform_6, window_bounds = array<i64: 8, 32>}, {transform_indices = @transform_7, window_bounds = array<i64: 8, 32>}, {transform_indices = @transform_8, window_bounds = array<i64: 8, 32>}, {transform_indices = @transform_9, window_bounds = array<i64: 8, 2>}]} {
    %c0 = arith.constant 0 : index
    %c0_0 = arith.constant 0 : index
    %0 = vector.load %arg1[%c0, %c0_0] : memref<8x1xi32, #tpu.memory_space<vmem>>, vector<8x1xi32>
    %1 = tpu.iota {dimensions = array<i32: 1>} : vector<8x32xi32>
    %2 = vector.broadcast %0 : vector<8x1xi32> to vector<8x32xi32>
    %3 = arith.cmpi eq, %1, %2 : vector<8x32xi32>
    %cst = arith.constant 0.000000e+00 : f32
    %4 = vector.broadcast %cst : f32 to vector<8x1xf32>
    %cst_1 = arith.constant 0.000000e+00 : f32
    %5 = vector.broadcast %cst_1 : f32 to vector<8x1xf32>
    %c0_2 = arith.constant 0 : index
    %c0_3 = arith.constant 0 : index
    %6 = vector.load %arg2[%c0_2, %c0_3] : memref<8x32xf32, #tpu.memory_space<vmem>>, vector<8x32xf32>
    %c0_4 = arith.constant 0 : index
    %c0_5 = arith.constant 0 : index
    %7 = vector.load %arg3[%c0_4, %c0_5] : memref<8x32xf32, #tpu.memory_space<vmem>>, vector<8x32xf32>
    %cst_6 = arith.constant dense<0xFF800000> : vector<8xf32>
    %8 = vector.multi_reduction <maximumf>, %6, %cst_6 [1] : vector<8x32xf32> to vector<8xf32>
    %9 = vector.shape_cast %8 : vector<8xf32> to vector<8x1xf32>
    %10 = vector.broadcast %9 : vector<8x1xf32> to vector<8x32xf32>
    %11 = arith.subf %6, %10 : vector<8x32xf32>
    %12 = math.exp %11 : vector<8x32xf32>
    %cst_7 = arith.constant dense<0.000000e+00> : vector<8xf32>
    %13 = vector.multi_reduction <add>, %12, %cst_7 [1] : vector<8x32xf32> to vector<8xf32>
    %14 = vector.shape_cast %13 : vector<8xf32> to vector<8x1xf32>
    %15 = math.log %14 : vector<8x1xf32>
    %16 = vector.broadcast %15 : vector<8x1xf32> to vector<8x32xf32>
    %17 = arith.subf %11, %16 : vector<8x32xf32>
    %18 = tpu.reciprocal %14 : vector<8x1xf32> -> vector<8x1xf32>
    %19 = vector.broadcast %18 : vector<8x1xf32> to vector<8x32xf32>
    %20 = arith.mulf %12, %19 : vector<8x32xf32>
    %cst_8 = arith.constant dense<0xFF800000> : vector<8xf32>
    %21 = vector.multi_reduction <maximumf>, %7, %cst_8 [1] : vector<8x32xf32> to vector<8xf32>
    %22 = vector.shape_cast %21 : vector<8xf32> to vector<8x1xf32>
    %23 = vector.broadcast %22 : vector<8x1xf32> to vector<8x32xf32>
    %24 = arith.subf %7, %23 : vector<8x32xf32>
    %25 = math.exp %24 : vector<8x32xf32>
    %cst_9 = arith.constant dense<0.000000e+00> : vector<8xf32>
    %26 = vector.multi_reduction <add>, %25, %cst_9 [1] : vector<8x32xf32> to vector<8xf32>
    %27 = vector.shape_cast %26 : vector<8xf32> to vector<8x1xf32>
    %28 = math.log %27 : vector<8x1xf32>
    %29 = vector.broadcast %28 : vector<8x1xf32> to vector<8x32xf32>
    %30 = arith.subf %24, %29 : vector<8x32xf32>
    %31 = tpu.reciprocal %27 : vector<8x1xf32> -> vector<8x1xf32>
    %32 = vector.broadcast %31 : vector<8x1xf32> to vector<8x32xf32>
    %33 = arith.mulf %25, %32 : vector<8x32xf32>
    %cst_10 = arith.constant 1.000000e-07 : f32
    %34 = vector.broadcast %cst_10 : f32 to vector<8x32xf32>
    %35 = arith.addf %20, %34 : vector<8x32xf32>
    %36 = math.log %35 : vector<8x32xf32>
    %cst_11 = arith.constant 0.000000e+00 : f32
    %37 = vector.broadcast %cst_11 : f32 to vector<8x32xf32>
    %38 = arith.subf %37, %36 : vector<8x32xf32>
    %cst_12 = arith.constant 1.000000e-07 : f32
    %39 = vector.broadcast %cst_12 : f32 to vector<8x32xf32>
    %40 = arith.addf %33, %39 : vector<8x32xf32>
    %41 = math.log %40 : vector<8x32xf32>
    %cst_13 = arith.constant 0.000000e+00 : f32
    %42 = vector.broadcast %cst_13 : f32 to vector<8x32xf32>
    %43 = arith.subf %42, %41 : vector<8x32xf32>
    %44 = arith.addf %17, %30 : vector<8x32xf32>
    %cst_14 = arith.constant 0.000000e+00 : f32
    %45 = vector.broadcast %cst_14 : f32 to vector<8x32xf32>
    %46 = arith.select %3, %44, %45 : vector<8x32xi1>, vector<8x32xf32>
    %cst_15 = arith.constant dense<0.000000e+00> : vector<8xf32>
    %47 = vector.multi_reduction <add>, %46, %cst_15 [1] : vector<8x32xf32> to vector<8xf32>
    %48 = vector.shape_cast %47 : vector<8xf32> to vector<8x1xf32>
    %49 = arith.mulf %38, %33 : vector<8x32xf32>
    %cst_16 = arith.constant dense<0.000000e+00> : vector<8xf32>
    %50 = vector.multi_reduction <add>, %49, %cst_16 [1] : vector<8x32xf32> to vector<8xf32>
    %51 = vector.shape_cast %50 : vector<8xf32> to vector<8x1xf32>
    %52 = arith.mulf %43, %20 : vector<8x32xf32>
    %cst_17 = arith.constant dense<0.000000e+00> : vector<8xf32>
    %53 = vector.multi_reduction <add>, %52, %cst_17 [1] : vector<8x32xf32> to vector<8xf32>
    %54 = vector.shape_cast %53 : vector<8xf32> to vector<8x1xf32>
    %55 = arith.addf %51, %54 : vector<8x1xf32>
    %56 = arith.mulf %38, %20 : vector<8x32xf32>
    %cst_18 = arith.constant dense<0.000000e+00> : vector<8xf32>
    %57 = vector.multi_reduction <add>, %56, %cst_18 [1] : vector<8x32xf32> to vector<8xf32>
    %58 = vector.shape_cast %57 : vector<8xf32> to vector<8x1xf32>
    %59 = arith.mulf %43, %33 : vector<8x32xf32>
    %cst_19 = arith.constant dense<0.000000e+00> : vector<8xf32>
    %60 = vector.multi_reduction <add>, %59, %cst_19 [1] : vector<8x32xf32> to vector<8xf32>
    %61 = vector.shape_cast %60 : vector<8xf32> to vector<8x1xf32>
    %62 = arith.addf %58, %61 : vector<8x1xf32>
    %cst_20 = arith.constant -0.899999976 : f32
    %63 = vector.broadcast %cst_20 : f32 to vector<8x1xf32>
    %64 = arith.mulf %63, %48 : vector<8x1xf32>
    %cst_21 = arith.constant 1.000000e-01 : f32
    %65 = vector.broadcast %cst_21 : f32 to vector<8x1xf32>
    %66 = arith.mulf %65, %55 : vector<8x1xf32>
    %67 = arith.addf %64, %66 : vector<8x1xf32>
    %68 = arith.addf %4, %67 : vector<8x1xf32>
    %cst_22 = arith.constant 1.000000e+00 : f32
    %69 = vector.broadcast %cst_22 : f32 to vector<8x1xf32>
    %70 = arith.mulf %69, %62 : vector<8x1xf32>
    %71 = arith.addf %5, %70 : vector<8x1xf32>
    %c0_23 = arith.constant 0 : index
    %c0_24 = arith.constant 0 : index
    %72 = vector.load %arg4[%c0_23, %c0_24] : memref<8x32xf32, #tpu.memory_space<vmem>>, vector<8x32xf32>
    %c0_25 = arith.constant 0 : index
    %c0_26 = arith.constant 0 : index
    %73 = vector.load %arg5[%c0_25, %c0_26] : memref<8x32xf32, #tpu.memory_space<vmem>>, vector<8x32xf32>
    %cst_27 = arith.constant dense<0xFF800000> : vector<8xf32>
    %74 = vector.multi_reduction <maximumf>, %72, %cst_27 [1] : vector<8x32xf32> to vector<8xf32>
    %75 = vector.shape_cast %74 : vector<8xf32> to vector<8x1xf32>
    %76 = vector.broadcast %75 : vector<8x1xf32> to vector<8x32xf32>
    %77 = arith.subf %72, %76 : vector<8x32xf32>
    %78 = math.exp %77 : vector<8x32xf32>
    %cst_28 = arith.constant dense<0.000000e+00> : vector<8xf32>
    %79 = vector.multi_reduction <add>, %78, %cst_28 [1] : vector<8x32xf32> to vector<8xf32>
    %80 = vector.shape_cast %79 : vector<8xf32> to vector<8x1xf32>
    %81 = math.log %80 : vector<8x1xf32>
    %82 = vector.broadcast %81 : vector<8x1xf32> to vector<8x32xf32>
    %83 = arith.subf %77, %82 : vector<8x32xf32>
    %84 = tpu.reciprocal %80 : vector<8x1xf32> -> vector<8x1xf32>
    %85 = vector.broadcast %84 : vector<8x1xf32> to vector<8x32xf32>
    %86 = arith.mulf %78, %85 : vector<8x32xf32>
    %cst_29 = arith.constant dense<0xFF800000> : vector<8xf32>
    %87 = vector.multi_reduction <maximumf>, %73, %cst_29 [1] : vector<8x32xf32> to vector<8xf32>
    %88 = vector.shape_cast %87 : vector<8xf32> to vector<8x1xf32>
    %89 = vector.broadcast %88 : vector<8x1xf32> to vector<8x32xf32>
    %90 = arith.subf %73, %89 : vector<8x32xf32>
    %91 = math.exp %90 : vector<8x32xf32>
    %cst_30 = arith.constant dense<0.000000e+00> : vector<8xf32>
    %92 = vector.multi_reduction <add>, %91, %cst_30 [1] : vector<8x32xf32> to vector<8xf32>
    %93 = vector.shape_cast %92 : vector<8xf32> to vector<8x1xf32>
    %94 = math.log %93 : vector<8x1xf32>
    %95 = vector.broadcast %94 : vector<8x1xf32> to vector<8x32xf32>
    %96 = arith.subf %90, %95 : vector<8x32xf32>
    %97 = tpu.reciprocal %93 : vector<8x1xf32> -> vector<8x1xf32>
    %98 = vector.broadcast %97 : vector<8x1xf32> to vector<8x32xf32>
    %99 = arith.mulf %91, %98 : vector<8x32xf32>
    %cst_31 = arith.constant 1.000000e-07 : f32
    %100 = vector.broadcast %cst_31 : f32 to vector<8x32xf32>
    %101 = arith.addf %86, %100 : vector<8x32xf32>
    %102 = math.log %101 : vector<8x32xf32>
    %cst_32 = arith.constant 0.000000e+00 : f32
    %103 = vector.broadcast %cst_32 : f32 to vector<8x32xf32>
    %104 = arith.subf %103, %102 : vector<8x32xf32>
    %cst_33 = arith.constant 1.000000e-07 : f32
    %105 = vector.broadcast %cst_33 : f32 to vector<8x32xf32>
    %106 = arith.addf %99, %105 : vector<8x32xf32>
    %107 = math.log %106 : vector<8x32xf32>
    %cst_34 = arith.constant 0.000000e+00 : f32
    %108 = vector.broadcast %cst_34 : f32 to vector<8x32xf32>
    %109 = arith.subf %108, %107 : vector<8x32xf32>
    %110 = arith.addf %83, %96 : vector<8x32xf32>
    %cst_35 = arith.constant 0.000000e+00 : f32
    %111 = vector.broadcast %cst_35 : f32 to vector<8x32xf32>
    %112 = arith.select %3, %110, %111 : vector<8x32xi1>, vector<8x32xf32>
    %cst_36 = arith.constant dense<0.000000e+00> : vector<8xf32>
    %113 = vector.multi_reduction <add>, %112, %cst_36 [1] : vector<8x32xf32> to vector<8xf32>
    %114 = vector.shape_cast %113 : vector<8xf32> to vector<8x1xf32>
    %115 = arith.mulf %104, %99 : vector<8x32xf32>
    %cst_37 = arith.constant dense<0.000000e+00> : vector<8xf32>
    %116 = vector.multi_reduction <add>, %115, %cst_37 [1] : vector<8x32xf32> to vector<8xf32>
    %117 = vector.shape_cast %116 : vector<8xf32> to vector<8x1xf32>
    %118 = arith.mulf %109, %86 : vector<8x32xf32>
    %cst_38 = arith.constant dense<0.000000e+00> : vector<8xf32>
    %119 = vector.multi_reduction <add>, %118, %cst_38 [1] : vector<8x32xf32> to vector<8xf32>
    %120 = vector.shape_cast %119 : vector<8xf32> to vector<8x1xf32>
    %121 = arith.addf %117, %120 : vector<8x1xf32>
    %122 = arith.mulf %104, %86 : vector<8x32xf32>
    %cst_39 = arith.constant dense<0.000000e+00> : vector<8xf32>
    %123 = vector.multi_reduction <add>, %122, %cst_39 [1] : vector<8x32xf32> to vector<8xf32>
    %124 = vector.shape_cast %123 : vector<8xf32> to vector<8x1xf32>
    %125 = arith.mulf %109, %99 : vector<8x32xf32>
    %cst_40 = arith.constant dense<0.000000e+00> : vector<8xf32>
    %126 = vector.multi_reduction <add>, %125, %cst_40 [1] : vector<8x32xf32> to vector<8xf32>
    %127 = vector.shape_cast %126 : vector<8xf32> to vector<8x1xf32>
    %128 = arith.addf %124, %127 : vector<8x1xf32>
    %cst_41 = arith.constant -0.899999976 : f32
    %129 = vector.broadcast %cst_41 : f32 to vector<8x1xf32>
    %130 = arith.mulf %129, %114 : vector<8x1xf32>
    %cst_42 = arith.constant 1.000000e-01 : f32
    %131 = vector.broadcast %cst_42 : f32 to vector<8x1xf32>
    %132 = arith.mulf %131, %121 : vector<8x1xf32>
    %133 = arith.addf %130, %132 : vector<8x1xf32>
    %134 = arith.addf %68, %133 : vector<8x1xf32>
    %cst_43 = arith.constant 1.000000e+00 : f32
    %135 = vector.broadcast %cst_43 : f32 to vector<8x1xf32>
    %136 = arith.mulf %135, %128 : vector<8x1xf32>
    %137 = arith.addf %71, %136 : vector<8x1xf32>
    %c0_44 = arith.constant 0 : index
    %c0_45 = arith.constant 0 : index
    %138 = vector.load %arg6[%c0_44, %c0_45] : memref<8x32xf32, #tpu.memory_space<vmem>>, vector<8x32xf32>
    %c0_46 = arith.constant 0 : index
    %c0_47 = arith.constant 0 : index
    %139 = vector.load %arg7[%c0_46, %c0_47] : memref<8x32xf32, #tpu.memory_space<vmem>>, vector<8x32xf32>
    %cst_48 = arith.constant dense<0xFF800000> : vector<8xf32>
    %140 = vector.multi_reduction <maximumf>, %138, %cst_48 [1] : vector<8x32xf32> to vector<8xf32>
    %141 = vector.shape_cast %140 : vector<8xf32> to vector<8x1xf32>
    %142 = vector.broadcast %141 : vector<8x1xf32> to vector<8x32xf32>
    %143 = arith.subf %138, %142 : vector<8x32xf32>
    %144 = math.exp %143 : vector<8x32xf32>
    %cst_49 = arith.constant dense<0.000000e+00> : vector<8xf32>
    %145 = vector.multi_reduction <add>, %144, %cst_49 [1] : vector<8x32xf32> to vector<8xf32>
    %146 = vector.shape_cast %145 : vector<8xf32> to vector<8x1xf32>
    %147 = math.log %146 : vector<8x1xf32>
    %148 = vector.broadcast %147 : vector<8x1xf32> to vector<8x32xf32>
    %149 = arith.subf %143, %148 : vector<8x32xf32>
    %150 = tpu.reciprocal %146 : vector<8x1xf32> -> vector<8x1xf32>
    %151 = vector.broadcast %150 : vector<8x1xf32> to vector<8x32xf32>
    %152 = arith.mulf %144, %151 : vector<8x32xf32>
    %cst_50 = arith.constant dense<0xFF800000> : vector<8xf32>
    %153 = vector.multi_reduction <maximumf>, %139, %cst_50 [1] : vector<8x32xf32> to vector<8xf32>
    %154 = vector.shape_cast %153 : vector<8xf32> to vector<8x1xf32>
    %155 = vector.broadcast %154 : vector<8x1xf32> to vector<8x32xf32>
    %156 = arith.subf %139, %155 : vector<8x32xf32>
    %157 = math.exp %156 : vector<8x32xf32>
    %cst_51 = arith.constant dense<0.000000e+00> : vector<8xf32>
    %158 = vector.multi_reduction <add>, %157, %cst_51 [1] : vector<8x32xf32> to vector<8xf32>
    %159 = vector.shape_cast %158 : vector<8xf32> to vector<8x1xf32>
    %160 = math.log %159 : vector<8x1xf32>
    %161 = vector.broadcast %160 : vector<8x1xf32> to vector<8x32xf32>
    %162 = arith.subf %156, %161 : vector<8x32xf32>
    %163 = tpu.reciprocal %159 : vector<8x1xf32> -> vector<8x1xf32>
    %164 = vector.broadcast %163 : vector<8x1xf32> to vector<8x32xf32>
    %165 = arith.mulf %157, %164 : vector<8x32xf32>
    %cst_52 = arith.constant 1.000000e-07 : f32
    %166 = vector.broadcast %cst_52 : f32 to vector<8x32xf32>
    %167 = arith.addf %152, %166 : vector<8x32xf32>
    %168 = math.log %167 : vector<8x32xf32>
    %cst_53 = arith.constant 0.000000e+00 : f32
    %169 = vector.broadcast %cst_53 : f32 to vector<8x32xf32>
    %170 = arith.subf %169, %168 : vector<8x32xf32>
    %cst_54 = arith.constant 1.000000e-07 : f32
    %171 = vector.broadcast %cst_54 : f32 to vector<8x32xf32>
    %172 = arith.addf %165, %171 : vector<8x32xf32>
    %173 = math.log %172 : vector<8x32xf32>
    %cst_55 = arith.constant 0.000000e+00 : f32
    %174 = vector.broadcast %cst_55 : f32 to vector<8x32xf32>
    %175 = arith.subf %174, %173 : vector<8x32xf32>
    %176 = arith.addf %149, %162 : vector<8x32xf32>
    %cst_56 = arith.constant 0.000000e+00 : f32
    %177 = vector.broadcast %cst_56 : f32 to vector<8x32xf32>
    %178 = arith.select %3, %176, %177 : vector<8x32xi1>, vector<8x32xf32>
    %cst_57 = arith.constant dense<0.000000e+00> : vector<8xf32>
    %179 = vector.multi_reduction <add>, %178, %cst_57 [1] : vector<8x32xf32> to vector<8xf32>
    %180 = vector.shape_cast %179 : vector<8xf32> to vector<8x1xf32>
    %181 = arith.mulf %170, %165 : vector<8x32xf32>
    %cst_58 = arith.constant dense<0.000000e+00> : vector<8xf32>
    %182 = vector.multi_reduction <add>, %181, %cst_58 [1] : vector<8x32xf32> to vector<8xf32>
    %183 = vector.shape_cast %182 : vector<8xf32> to vector<8x1xf32>
    %184 = arith.mulf %175, %152 : vector<8x32xf32>
    %cst_59 = arith.constant dense<0.000000e+00> : vector<8xf32>
    %185 = vector.multi_reduction <add>, %184, %cst_59 [1] : vector<8x32xf32> to vector<8xf32>
    %186 = vector.shape_cast %185 : vector<8xf32> to vector<8x1xf32>
    %187 = arith.addf %183, %186 : vector<8x1xf32>
    %188 = arith.mulf %170, %152 : vector<8x32xf32>
    %cst_60 = arith.constant dense<0.000000e+00> : vector<8xf32>
    %189 = vector.multi_reduction <add>, %188, %cst_60 [1] : vector<8x32xf32> to vector<8xf32>
    %190 = vector.shape_cast %189 : vector<8xf32> to vector<8x1xf32>
    %191 = arith.mulf %175, %165 : vector<8x32xf32>
    %cst_61 = arith.constant dense<0.000000e+00> : vector<8xf32>
    %192 = vector.multi_reduction <add>, %191, %cst_61 [1] : vector<8x32xf32> to vector<8xf32>
    %193 = vector.shape_cast %192 : vector<8xf32> to vector<8x1xf32>
    %194 = arith.addf %190, %193 : vector<8x1xf32>
    %cst_62 = arith.constant -0.899999976 : f32
    %195 = vector.broadcast %cst_62 : f32 to vector<8x1xf32>
    %196 = arith.mulf %195, %180 : vector<8x1xf32>
    %cst_63 = arith.constant 1.000000e-01 : f32
    %197 = vector.broadcast %cst_63 : f32 to vector<8x1xf32>
    %198 = arith.mulf %197, %187 : vector<8x1xf32>
    %199 = arith.addf %196, %198 : vector<8x1xf32>
    %200 = arith.addf %134, %199 : vector<8x1xf32>
    %cst_64 = arith.constant 1.000000e+00 : f32
    %201 = vector.broadcast %cst_64 : f32 to vector<8x1xf32>
    %202 = arith.mulf %201, %194 : vector<8x1xf32>
    %203 = arith.addf %137, %202 : vector<8x1xf32>
    %c0_65 = arith.constant 0 : index
    %c0_66 = arith.constant 0 : index
    %204 = vector.load %arg8[%c0_65, %c0_66] : memref<8x32xf32, #tpu.memory_space<vmem>>, vector<8x32xf32>
    %c0_67 = arith.constant 0 : index
    %c0_68 = arith.constant 0 : index
    %205 = vector.load %arg9[%c0_67, %c0_68] : memref<8x32xf32, #tpu.memory_space<vmem>>, vector<8x32xf32>
    %cst_69 = arith.constant dense<0xFF800000> : vector<8xf32>
    %206 = vector.multi_reduction <maximumf>, %204, %cst_69 [1] : vector<8x32xf32> to vector<8xf32>
    %207 = vector.shape_cast %206 : vector<8xf32> to vector<8x1xf32>
    %208 = vector.broadcast %207 : vector<8x1xf32> to vector<8x32xf32>
    %209 = arith.subf %204, %208 : vector<8x32xf32>
    %210 = math.exp %209 : vector<8x32xf32>
    %cst_70 = arith.constant dense<0.000000e+00> : vector<8xf32>
    %211 = vector.multi_reduction <add>, %210, %cst_70 [1] : vector<8x32xf32> to vector<8xf32>
    %212 = vector.shape_cast %211 : vector<8xf32> to vector<8x1xf32>
    %213 = math.log %212 : vector<8x1xf32>
    %214 = vector.broadcast %213 : vector<8x1xf32> to vector<8x32xf32>
    %215 = arith.subf %209, %214 : vector<8x32xf32>
    %216 = tpu.reciprocal %212 : vector<8x1xf32> -> vector<8x1xf32>
    %217 = vector.broadcast %216 : vector<8x1xf32> to vector<8x32xf32>
    %218 = arith.mulf %210, %217 : vector<8x32xf32>
    %cst_71 = arith.constant dense<0xFF800000> : vector<8xf32>
    %219 = vector.multi_reduction <maximumf>, %205, %cst_71 [1] : vector<8x32xf32> to vector<8xf32>
    %220 = vector.shape_cast %219 : vector<8xf32> to vector<8x1xf32>
    %221 = vector.broadcast %220 : vector<8x1xf32> to vector<8x32xf32>
    %222 = arith.subf %205, %221 : vector<8x32xf32>
    %223 = math.exp %222 : vector<8x32xf32>
    %cst_72 = arith.constant dense<0.000000e+00> : vector<8xf32>
    %224 = vector.multi_reduction <add>, %223, %cst_72 [1] : vector<8x32xf32> to vector<8xf32>
    %225 = vector.shape_cast %224 : vector<8xf32> to vector<8x1xf32>
    %226 = math.log %225 : vector<8x1xf32>
    %227 = vector.broadcast %226 : vector<8x1xf32> to vector<8x32xf32>
    %228 = arith.subf %222, %227 : vector<8x32xf32>
    %229 = tpu.reciprocal %225 : vector<8x1xf32> -> vector<8x1xf32>
    %230 = vector.broadcast %229 : vector<8x1xf32> to vector<8x32xf32>
    %231 = arith.mulf %223, %230 : vector<8x32xf32>
    %cst_73 = arith.constant 1.000000e-07 : f32
    %232 = vector.broadcast %cst_73 : f32 to vector<8x32xf32>
    %233 = arith.addf %218, %232 : vector<8x32xf32>
    %234 = math.log %233 : vector<8x32xf32>
    %cst_74 = arith.constant 0.000000e+00 : f32
    %235 = vector.broadcast %cst_74 : f32 to vector<8x32xf32>
    %236 = arith.subf %235, %234 : vector<8x32xf32>
    %cst_75 = arith.constant 1.000000e-07 : f32
    %237 = vector.broadcast %cst_75 : f32 to vector<8x32xf32>
    %238 = arith.addf %231, %237 : vector<8x32xf32>
    %239 = math.log %238 : vector<8x32xf32>
    %cst_76 = arith.constant 0.000000e+00 : f32
    %240 = vector.broadcast %cst_76 : f32 to vector<8x32xf32>
    %241 = arith.subf %240, %239 : vector<8x32xf32>
    %242 = arith.addf %215, %228 : vector<8x32xf32>
    %cst_77 = arith.constant 0.000000e+00 : f32
    %243 = vector.broadcast %cst_77 : f32 to vector<8x32xf32>
    %244 = arith.select %3, %242, %243 : vector<8x32xi1>, vector<8x32xf32>
    %cst_78 = arith.constant dense<0.000000e+00> : vector<8xf32>
    %245 = vector.multi_reduction <add>, %244, %cst_78 [1] : vector<8x32xf32> to vector<8xf32>
    %246 = vector.shape_cast %245 : vector<8xf32> to vector<8x1xf32>
    %247 = arith.mulf %236, %231 : vector<8x32xf32>
    %cst_79 = arith.constant dense<0.000000e+00> : vector<8xf32>
    %248 = vector.multi_reduction <add>, %247, %cst_79 [1] : vector<8x32xf32> to vector<8xf32>
    %249 = vector.shape_cast %248 : vector<8xf32> to vector<8x1xf32>
    %250 = arith.mulf %241, %218 : vector<8x32xf32>
    %cst_80 = arith.constant dense<0.000000e+00> : vector<8xf32>
    %251 = vector.multi_reduction <add>, %250, %cst_80 [1] : vector<8x32xf32> to vector<8xf32>
    %252 = vector.shape_cast %251 : vector<8xf32> to vector<8x1xf32>
    %253 = arith.addf %249, %252 : vector<8x1xf32>
    %254 = arith.mulf %236, %218 : vector<8x32xf32>
    %cst_81 = arith.constant dense<0.000000e+00> : vector<8xf32>
    %255 = vector.multi_reduction <add>, %254, %cst_81 [1] : vector<8x32xf32> to vector<8xf32>
    %256 = vector.shape_cast %255 : vector<8xf32> to vector<8x1xf32>
    %257 = arith.mulf %241, %231 : vector<8x32xf32>
    %cst_82 = arith.constant dense<0.000000e+00> : vector<8xf32>
    %258 = vector.multi_reduction <add>, %257, %cst_82 [1] : vector<8x32xf32> to vector<8xf32>
    %259 = vector.shape_cast %258 : vector<8xf32> to vector<8x1xf32>
    %260 = arith.addf %256, %259 : vector<8x1xf32>
    %cst_83 = arith.constant -1.800000e+00 : f32
    %261 = vector.broadcast %cst_83 : f32 to vector<8x1xf32>
    %262 = arith.mulf %261, %246 : vector<8x1xf32>
    %cst_84 = arith.constant 2.000000e-01 : f32
    %263 = vector.broadcast %cst_84 : f32 to vector<8x1xf32>
    %264 = arith.mulf %263, %253 : vector<8x1xf32>
    %265 = arith.addf %262, %264 : vector<8x1xf32>
    %266 = arith.addf %200, %265 : vector<8x1xf32>
    %cst_85 = arith.constant 2.000000e+00 : f32
    %267 = vector.broadcast %cst_85 : f32 to vector<8x1xf32>
    %268 = arith.mulf %267, %260 : vector<8x1xf32>
    %269 = arith.addf %203, %268 : vector<8x1xf32>
    %270 = tpu.concatenate %266, %269 in 1 : vector<8x1xf32>, vector<8x1xf32> -> vector<8x2xf32>
    %c0_86 = arith.constant 0 : index
    %c0_87 = arith.constant 0 : index
    %271 = vector.load %arg10[%c0_86, %c0_87] : memref<8x2xf32, #tpu.memory_space<vmem>>, vector<8x2xf32>
    tpu.vector_store %arg10[%c0_86, %c0_87], %270 {strides = array<i32>} : memref<8x2xf32, #tpu.memory_space<vmem>>, vector<8x2xf32>,
    return
  }
  func.func @transform_0(%arg0: i32) -> (i32, i32) {
    %c0_i32 = arith.constant 0 : i32
    %c0_i32_0 = arith.constant 0 : i32
    return %arg0, %c0_i32 : i32, i32
  }
  func.func @transform_1(%arg0: i32) -> (i32, i32) {
    %c0_i32 = arith.constant 0 : i32
    %c0_i32_0 = arith.constant 0 : i32
    return %arg0, %c0_i32 : i32, i32
  }
  func.func @transform_2(%arg0: i32) -> (i32, i32) {
    %c0_i32 = arith.constant 0 : i32
    %c0_i32_0 = arith.constant 0 : i32
    return %arg0, %c0_i32 : i32, i32
  }
  func.func @transform_3(%arg0: i32) -> (i32, i32) {
    %c0_i32 = arith.constant 0 : i32
    %c0_i32_0 = arith.constant 0 : i32
    return %arg0, %c0_i32 : i32, i32
  }
  func.func @transform_4(%arg0: i32) -> (i32, i32) {
    %c0_i32 = arith.constant 0 : i32
    %c0_i32_0 = arith.constant 0 : i32
    return %arg0, %c0_i32 : i32, i32
  }
  func.func @transform_5(%arg0: i32) -> (i32, i32) {
    %c0_i32 = arith.constant 0 : i32
    %c0_i32_0 = arith.constant 0 : i32
    return %arg0, %c0_i32 : i32, i32
  }
  func.func @transform_6(%arg0: i32) -> (i32, i32) {
    %c0_i32 = arith.constant 0 : i32
    %c0_i32_0 = arith.constant 0 : i32
    return %arg0, %c0_i32 : i32, i32
  }
  func.func @transform_7(%arg0: i32) -> (i32, i32) {
    %c0_i32 = arith.constant 0 : i32
    %c0_i32_0 = arith.constant 0 : i32
    return %arg0, %c0_i32 : i32, i32
  }
  func.func @transform_8(%arg0: i32) -> (i32, i32) {
    %c0_i32 = arith.constant 0 : i32
    %c0_i32_0 = arith.constant 0 : i32
    return %arg0, %c0_i32 : i32, i32
  }
  func.func @transform_9(%arg0: i32) -> (i32, i32) {
    %c0_i32 = arith.constant 0 : i32
    %c0_i32_0 = arith.constant 0 : i32
    return %arg0, %c0_i32 : i32, i32
  }
}

</mosaic_0001>

<llo_original>
// kernel: tpu_custom_call.1
$region0: #{tpu_custom_call.1}
  #allocation0 [shape = 'u32[]', space=smem, size = 0x4, offset = 0x4, fixed_abs, tag = 'smem constant byte address 0x4 - core index']
  #allocation1 [shape = 'u32[72,128]{1,0:T(1,128)}', space=vmem, size = 0x9000, scoped, tag = 'internal scratch']
  %s0 = inlined_call_operand.vmem [shape: s32[12,1], index: 0, kind: input, shape index: {}]
  %s1 = inlined_call_operand.vmem [shape: f32[12,32], index: 1, kind: input, shape index: {}]
  %s2 = inlined_call_operand.hbm [shape: f32[12,32], index: 2, kind: input, shape index: {}]
  %s3 = inlined_call_operand.hbm [shape: f32[12,32], index: 3, kind: input, shape index: {}]
  %s4 = inlined_call_operand.hbm [shape: f32[12,32], index: 4, kind: input, shape index: {}]
  %s5 = inlined_call_operand.hbm [shape: f32[12,32], index: 5, kind: input, shape index: {}]
  %s6 = inlined_call_operand.hbm [shape: f32[12,32], index: 6, kind: input, shape index: {}]
  %s7 = inlined_call_operand.hbm [shape: f32[12,32], index: 7, kind: input, shape index: {}]
  %s8 = inlined_call_operand.hbm [shape: f32[12,32], index: 8, kind: input, shape index: {}]
  %s9 = inlined_call_operand.vmem [shape: f32[12,2], index: 9, kind: output, shape index: {}]
  %s10 = sld [smem:[#allocation0]]
  $region97: #{tpu_custom_call.1} parent=0
    _
  %s12 = ssub.s32 1, %s10
  %s13 = scalar_select 0, %s12, %s10
  $region1: #{tpu_custom_call.1} parent=0
    #allocation2 [shape = 'u8[8192]{0}', space=vmem, size = 0x2000, scoped, tag = 'input window, operand 2']
    #allocation3 [shape = 's32[2]{0}', space=sflag, size = 0x8, scoped, tag = 'scoped memory for tpu_custom_call.1']
    #allocation4 [shape = 'u8[8192]{0}', space=vmem, size = 0x2000, scoped, tag = 'input window, operand 3']
    #allocation5 [shape = 's32[2]{0}', space=sflag, size = 0x8, scoped, tag = 'scoped memory for tpu_custom_call.1']
    #allocation6 [shape = 'u8[8192]{0}', space=vmem, size = 0x2000, scoped, tag = 'input window, operand 4']
    #allocation7 [shape = 'u8[8192]{0}', space=vmem, size = 0x2000, scoped, tag = 'input window, operand 5']
    #allocation8 [shape = 's32[2]{0}', space=sflag, size = 0x8, scoped, tag = 'scoped memory for tpu_custom_call.1']
    #allocation9 [shape = 'u8[8192]{0}', space=vmem, size = 0x2000, scoped, tag = 'input window, operand 6']
    #allocation10 [shape = 'u8[8192]{0}', space=vmem, size = 0x2000, scoped, tag = 'input window, operand 7']
    #allocation11 [shape = 's32[2]{0}', space=sflag, size = 0x8, scoped, tag = 'scoped memory for tpu_custom_call.1']
    #allocation12 [shape = 'u8[8192]{0}', space=vmem, size = 0x2000, scoped, tag = 'input window, operand 8']
    %14 = vsyncpa [#allocation3], 0
    %s15 = scalar_lea.sflag [#allocation3], 1
    %16 = vsyncpa %s15, 0
    %17 = vsyncpa [#allocation5], 0
    %s18 = scalar_lea.sflag [#allocation5], 1
    %19 = vsyncpa %s18, 0
    %20 = vsyncpa [#allocation8], 0
    %s21 = scalar_lea.sflag [#allocation8], 1
    %22 = vsyncpa %s21, 0
    %23 = vsyncpa [#allocation11], 0
    %s24 = scalar_lea.sflag [#allocation11], 1
    %25 = vsyncpa %s24, 0
    loop: start=0, step=1, limit=4
    $region2: #{tpu_custom_call.1} parent=1 // loop_pre_header
      _
    $region3: #{tpu_custom_call.1} parent=1 // loop_header
      %s27 = sphi 0, %s31
      %p28 = scmp.ge.s32.totalorder %s27, 4
      %s37 = sphi 0, %s39
      %s40 = sphi 0, %s37
      %s41 = sphi 0, %s40
      %s57 = sphi 0, %s41
      %s63 = sphi 0, %s65
      %s66 = sphi 0, %s63
      %s67 = sphi 0, %s66
      %s83 = sphi 0, %s67
      %s89 = sphi 0, %s91
      %s92 = sphi 0, %s89
      %s93 = sphi 0, %s92
      %s109 = sphi 0, %s93
      %s115 = sphi 0, %s117
      %s118 = sphi 0, %s115
      %s119 = sphi 0, %s118
      %s135 = sphi 0, %s119
      %s141 = sphi 0, %s143
      %s144 = sphi 0, %s141
      %s145 = sphi 0, %s144
      %s161 = sphi 0, %s145
      %s167 = sphi 0, %s169
      %s170 = sphi 0, %s167
      %s171 = sphi 0, %s170
      %s187 = sphi 0, %s171
      %s193 = sphi 0, %s195
      %s196 = sphi 0, %s193
      %s197 = sphi 0, %s196
      %s213 = sphi 0, %s197
      %s219 = sphi 0, %s221
      %s222 = sphi 0, %s219
      %s223 = sphi 0, %s222
      %s239 = sphi 0, %s223
      %s245 = sphi 0, %s247
      %s248 = sphi 0, %s245
      %s249 = sphi 0, %s248
      %s265 = sphi 0, %s249
      %s271 = sphi 0, %s273
      %s274 = sphi 0, %s271
      %s275 = sphi 0, %s274
      %s291 = sphi 0, %s275
    $region4: #{tpu_custom_call.1} parent=1 // loop_header_branch
      %30 = sbr.rel (%p28) target = $region8
    $region5: #{tpu_custom_call.1} parent=1 // loop_body
      %s32 = ssub.s32 %s27, 1
      %s33 = ssub.s32 %s27, 2
      %s34 = sadd.s32 %s27, 1
      %s35 = ssub.s32 %s27, %s34
      %p36 = scmp.eq.s32.totalorder %s35, 0
      %s38 = sadd.s32 %s37, 1
      %s39 = scalar_select %p36, %s37, %s38
      %p42 = pneg %p36
      %p43 = scmp.eq.s32.totalorder %s27, 1
      %p44 = por %p42, %p43
      %p45 = scmp.ne.s32.totalorder %s37, %s40
      %p46 = scmp.eq.s32.totalorder %s27, 0
      %p47 = por %p45, %p46
      %p48 = scmp.ne.s32.totalorder %s37, %s40
      %p49 = scmp.eq.s32.totalorder %s32, 1
      %p50 = por %p48, %p49
      %p51 = scmp.ne.s32.totalorder %s40, %s41
      %p52 = scmp.eq.s32.totalorder %s32, 0
      %p53 = por %p51, %p52
      %p54 = scmp.ne.s32.totalorder %s40, %s41
      %p55 = scmp.eq.s32.totalorder %s33, 1
      %p56 = por %p54, %p55
      %p58 = scmp.ne.s32.totalorder %s41, %s57
      %p59 = scmp.eq.s32.totalorder %s33, 0
      %p60 = por %p58, %p59
      %s61 = ssub.s32 %s27, %s34
      %p62 = scmp.eq.s32.totalorder %s61, 0
      %s64 = sadd.s32 %s63, 1
      %s65 = scalar_select %p62, %s63, %s64
      %p68 = pneg %p62
      %p69 = scmp.eq.s32.totalorder %s27, 1
      %p70 = por %p68, %p69
      %p71 = scmp.ne.s32.totalorder %s63, %s66
      %p72 = scmp.eq.s32.totalorder %s27, 0
      %p73 = por %p71, %p72
      %p74 = scmp.ne.s32.totalorder %s63, %s66
      %p75 = scmp.eq.s32.totalorder %s32, 1
      %p76 = por %p74, %p75
      %p77 = scmp.ne.s32.totalorder %s66, %s67
      %p78 = scmp.eq.s32.totalorder %s32, 0
      %p79 = por %p77, %p78
      %p80 = scmp.ne.s32.totalorder %s66, %s67
      %p81 = scmp.eq.s32.totalorder %s33, 1
      %p82 = por %p80, %p81
      %p84 = scmp.ne.s32.totalorder %s67, %s83
      %p85 = scmp.eq.s32.totalorder %s33, 0
      %p86 = por %p84, %p85
      %s87 = ssub.s32 %s27, %s34
      %p88 = scmp.eq.s32.totalorder %s87, 0
      %s90 = sadd.s32 %s89, 1
      %s91 = scalar_select %p88, %s89, %s90
      %p94 = pneg %p88
      %p95 = scmp.eq.s32.totalorder %s27, 1
      %p96 = por %p94, %p95
      %p97 = scmp.ne.s32.totalorder %s89, %s92
      %p98 = scmp.eq.s32.totalorder %s27, 0
      %p99 = por %p97, %p98
      %p100 = scmp.ne.s32.totalorder %s89, %s92
      %p101 = scmp.eq.s32.totalorder %s32, 1
      %p102 = por %p100, %p101
      %p103 = scmp.ne.s32.totalorder %s92, %s93
      %p104 = scmp.eq.s32.totalorder %s32, 0
      %p105 = por %p103, %p104
      %p106 = scmp.ne.s32.totalorder %s92, %s93
      %p107 = scmp.eq.s32.totalorder %s33, 1
      %p108 = por %p106, %p107
      %p110 = scmp.ne.s32.totalorder %s93, %s109
      %p111 = scmp.eq.s32.totalorder %s33, 0
      %p112 = por %p110, %p111
      %s113 = ssub.s32 %s27, %s34
      %p114 = scmp.eq.s32.totalorder %s113, 0
      %s116 = sadd.s32 %s115, 1
      %s117 = scalar_select %p114, %s115, %s116
      %p120 = pneg %p114
      %p121 = scmp.eq.s32.totalorder %s27, 1
      %p122 = por %p120, %p121
      %p123 = scmp.ne.s32.totalorder %s115, %s118
      %p124 = scmp.eq.s32.totalorder %s27, 0
      %p125 = por %p123, %p124
      %p126 = scmp.ne.s32.totalorder %s115, %s118
      %p127 = scmp.eq.s32.totalorder %s32, 1
      %p128 = por %p126, %p127
      %p129 = scmp.ne.s32.totalorder %s118, %s119
      %p130 = scmp.eq.s32.totalorder %s32, 0
      %p131 = por %p129, %p130
      %p132 = scmp.ne.s32.totalorder %s118, %s119
      %p133 = scmp.eq.s32.totalorder %s33, 1
      %p134 = por %p132, %p133
      %p136 = scmp.ne.s32.totalorder %s119, %s135
      %p137 = scmp.eq.s32.totalorder %s33, 0
      %p138 = por %p136, %p137
      %s139 = ssub.s32 %s27, %s34
      %p140 = scmp.eq.s32.totalorder %s139, 0
      %s142 = sadd.s32 %s141, 1
      %s143 = scalar_select %p140, %s141, %s142
      %p146 = pneg %p140
      %p147 = scmp.eq.s32.totalorder %s27, 1
      %p148 = por %p146, %p147
      %p149 = scmp.ne.s32.totalorder %s141, %s144
      %p150 = scmp.eq.s32.totalorder %s27, 0
      %p151 = por %p149, %p150
      %p152 = scmp.ne.s32.totalorder %s141, %s144
      %p153 = scmp.eq.s32.totalorder %s32, 1
      %p154 = por %p152, %p153
      %p155 = scmp.ne.s32.totalorder %s144, %s145
      %p156 = scmp.eq.s32.totalorder %s32, 0
      %p157 = por %p155, %p156
      %p158 = scmp.ne.s32.totalorder %s144, %s145
      %p159 = scmp.eq.s32.totalorder %s33, 1
      %p160 = por %p158, %p159
      %p162 = scmp.ne.s32.totalorder %s145, %s161
      %p163 = scmp.eq.s32.totalorder %s33, 0
      %p164 = por %p162, %p163
      %s165 = ssub.s32 %s27, %s34
      %p166 = scmp.eq.s32.totalorder %s165, 0
      %s168 = sadd.s32 %s167, 1
      %s169 = scalar_select %p166, %s167, %s168
      %p172 = pneg %p166
      %p173 = scmp.eq.s32.totalorder %s27, 1
      %p174 = por %p172, %p173
      %p175 = scmp.ne.s32.totalorder %s167, %s170
      %p176 = scmp.eq.s32.totalorder %s27, 0
      %p177 = por %p175, %p176
      %p178 = scmp.ne.s32.totalorder %s167, %s170
      %p179 = scmp.eq.s32.totalorder %s32, 1
      %p180 = por %p178, %p179
      %p181 = scmp.ne.s32.totalorder %s170, %s171
      %p182 = scmp.eq.s32.totalorder %s32, 0
      %p183 = por %p181, %p182
      %p184 = scmp.ne.s32.totalorder %s170, %s171
      %p185 = scmp.eq.s32.totalorder %s33, 1
      %p186 = por %p184, %p185
      %p188 = scmp.ne.s32.totalorder %s171, %s187
      %p189 = scmp.eq.s32.totalorder %s33, 0
      %p190 = por %p188, %p189
      %s191 = ssub.s32 %s27, %s34
      %p192 = scmp.eq.s32.totalorder %s191, 0
      %s194 = sadd.s32 %s193, 1
      %s195 = scalar_select %p192, %s193, %s194
      %p198 = pneg %p192
      %p199 = scmp.eq.s32.totalorder %s27, 1
      %p200 = por %p198, %p199
      %p201 = scmp.ne.s32.totalorder %s193, %s196
      %p202 = scmp.eq.s32.totalorder %s27, 0
      %p203 = por %p201, %p202
      %p204 = scmp.ne.s32.totalorder %s193, %s196
      %p205 = scmp.eq.s32.totalorder %s32, 1
      %p206 = por %p204, %p205
      %p207 = scmp.ne.s32.totalorder %s196, %s197
      %p208 = scmp.eq.s32.totalorder %s32, 0
      %p209 = por %p207, %p208
      %p210 = scmp.ne.s32.totalorder %s196, %s197
      %p211 = scmp.eq.s32.totalorder %s33, 1
      %p212 = por %p210, %p211
      %p214 = scmp.ne.s32.totalorder %s197, %s213
      %p215 = scmp.eq.s32.totalorder %s33, 0
      %p216 = por %p214, %p215
      %s217 = ssub.s32 %s27, %s34
      %p218 = scmp.eq.s32.totalorder %s217, 0
      %s220 = sadd.s32 %s219, 1
      %s221 = scalar_select %p218, %s219, %s220
      %p224 = pneg %p218
      %p225 = scmp.eq.s32.totalorder %s27, 1
      %p226 = por %p224, %p225
      %p227 = scmp.ne.s32.totalorder %s219, %s222
      %p228 = scmp.eq.s32.totalorder %s27, 0
      %p229 = por %p227, %p228
      %p230 = scmp.ne.s32.totalorder %s219, %s222
      %p231 = scmp.eq.s32.totalorder %s32, 1
      %p232 = por %p230, %p231
      %p233 = scmp.ne.s32.totalorder %s222, %s223
      %p234 = scmp.eq.s32.totalorder %s32, 0
      %p235 = por %p233, %p234
      %p236 = scmp.ne.s32.totalorder %s222, %s223
      %p237 = scmp.eq.s32.totalorder %s33, 1
      %p238 = por %p236, %p237
      %p240 = scmp.ne.s32.totalorder %s223, %s239
      %p241 = scmp.eq.s32.totalorder %s33, 0
      %p242 = por %p240, %p241
      %s243 = ssub.s32 %s27, %s34
      %p244 = scmp.eq.s32.totalorder %s243, 0
      %s246 = sadd.s32 %s245, 1
      %s247 = scalar_select %p244, %s245, %s246
      %p250 = pneg %p244
      %p251 = scmp.eq.s32.totalorder %s27, 1
      %p252 = por %p250, %p251
      %p253 = scmp.ne.s32.totalorder %s245, %s248
      %p254 = scmp.eq.s32.totalorder %s27, 0
      %p255 = por %p253, %p254
      %p256 = scmp.ne.s32.totalorder %s245, %s248
      %p257 = scmp.eq.s32.totalorder %s32, 1
      %p258 = por %p256, %p257
      %p259 = scmp.ne.s32.totalorder %s248, %s249
      %p260 = scmp.eq.s32.totalorder %s32, 0
      %p261 = por %p259, %p260
      %p262 = scmp.ne.s32.totalorder %s248, %s249
      %p263 = scmp.eq.s32.totalorder %s33, 1
      %p264 = por %p262, %p263
      %p266 = scmp.ne.s32.totalorder %s249, %s265
      %p267 = scmp.eq.s32.totalorder %s33, 0
      %p268 = por %p266, %p267
      %s269 = ssub.s32 %s27, %s34
      %p270 = scmp.eq.s32.totalorder %s269, 0
      %s272 = sadd.s32 %s271, 1
      %s273 = scalar_select %p270, %s271, %s272
      %p276 = pneg %p270
      %p277 = scmp.eq.s32.totalorder %s27, 1
      %p278 = por %p276, %p277
      %p279 = scmp.ne.s32.totalorder %s271, %s274
      %p280 = scmp.eq.s32.totalorder %s27, 0
      %p281 = por %p279, %p280
      %p282 = scmp.ne.s32.totalorder %s271, %s274
      %p283 = scmp.eq.s32.totalorder %s32, 1
      %p284 = por %p282, %p283
      %p285 = scmp.ne.s32.totalorder %s274, %s275
      %p286 = scmp.eq.s32.totalorder %s32, 0
      %p287 = por %p285, %p286
      %p288 = scmp.ne.s32.totalorder %s274, %s275
      %p289 = scmp.eq.s32.totalorder %s33, 1
      %p290 = por %p288, %p289
      %p292 = scmp.ne.s32.totalorder %s275, %s291
      %p293 = scmp.eq.s32.totalorder %s33, 0
      %p294 = por %p292, %p293
      %p295 = scmp.le.s32.totalorder 1, %s27
      %p296 = scmp.lt.s32.totalorder %s27, 3
      %p297 = pnand %p295, %p296
      %p298 = pneg %p297
      // Predicated region
      $region9: #{tpu_custom_call.1} parent=5 // pred_check
        _
      $region10: #{tpu_custom_call.1} parent=5 // pred_check_branch
        %300 = sbr.rel (%p297) target = $region12
      $region11: #{tpu_custom_call.1} parent=5 // pred_region
        %s301 = ssub.s32 %s27, 1
      $region12: #{tpu_custom_call.1} parent=5 // pred_fallthru
        _
      %p302 = scmp.lt.s32.totalorder %s27, 2
      // Predicated region
      $region13: #{tpu_custom_call.1} parent=5 // pred_check
        %p303 = pneg %p302
      $region14: #{tpu_custom_call.1} parent=5 // pred_check_branch
        %305 = sbr.rel (%p303) target = $region16
      $region15: #{tpu_custom_call.1} parent=5 // pred_region
        // Predicated region
        $region17: #{tpu_custom_call.1} parent=15 // pred_check
          %p306 = pneg %p47
        $region18: #{tpu_custom_call.1} parent=15 // pred_check_branch
          %308 = sbr.rel (%p306) target = $region20
        $region19: #{tpu_custom_call.1} parent=15 // pred_region
          %p309 = scmp.lt.s32.totalorder %s27, 1
          %s310 = scalar_select %p309, %s27, 1
          %s311 = smul.addr %s310, 8
          %s312 = scalar_lea.vmem %s0, %s311
        $region20: #{tpu_custom_call.1} parent=15 // pred_fallthru
          _
        // Predicated region
        $region21: #{tpu_custom_call.1} parent=15 // pred_check
          %p313 = pneg %p73
        $region22: #{tpu_custom_call.1} parent=15 // pred_check_branch
          %315 = sbr.rel (%p313) target = $region24
        $region23: #{tpu_custom_call.1} parent=15 // pred_region
          %p316 = scmp.lt.s32.totalorder %s27, 1
          %s317 = scalar_select %p316, %s27, 1
          %s318 = smul.addr %s317, 8
          %s319 = scalar_lea.vmem %s1, %s318
        $region24: #{tpu_custom_call.1} parent=15 // pred_fallthru
          _
        // Predicated region
        $region25: #{tpu_custom_call.1} parent=15 // pred_check
          %p320 = pneg %p99
        $region26: #{tpu_custom_call.1} parent=15 // pred_check_branch
          %322 = sbr.rel (%p320) target = $region28
        $region27: #{tpu_custom_call.1} parent=15 // pred_region
          %s323 = sand.u32 %s89, 1
          %s324 = scalar_lea.sflag [#allocation3], %s323
          %s325 = sand.u32 %s89, 1
          %s326 = smul.addr %s325, 8
          %s327 = scalar_lea.vmem [#allocation2], %s326
          %329 = vsyncadd %s324, 0
          %s330 = smul.addr %s27, 8
          %s331 = scalar_lea.hbm %s2, %s330
          %s333 = sshll.u32 %s331, 4
          %s334 = int_to_ptr.hbm [resolvable:$true] %s333
          %s335 = sshll.u32 %s327, 4
          %s336 = int_to_ptr.vmem [resolvable:$true] %s335
          %338 = dma.hbm_to_vmem [thread:$0]  %s334, 128, %s336, %s324
        $region28: #{tpu_custom_call.1} parent=15 // pred_fallthru
          _
        // Predicated region
        $region29: #{tpu_custom_call.1} parent=15 // pred_check
          %p339 = pneg %p125
        $region30: #{tpu_custom_call.1} parent=15 // pred_check_branch
          %341 = sbr.rel (%p339) target = $region32
        $region31: #{tpu_custom_call.1} parent=15 // pred_region
          %s342 = sand.u32 %s27, 1
          %s343 = scalar_lea.sflag [#allocation5], %s342
          %s344 = sand.u32 %s115, 1
          %s345 = smul.addr %s344, 8
          %s346 = scalar_lea.vmem [#allocation4], %s345
          %348 = vsyncadd %s343, 0
          %s349 = smul.addr %s27, 8
          %s350 = scalar_lea.hbm %s3, %s349
          %s352 = sshll.u32 %s350, 4
          %s353 = int_to_ptr.hbm [resolvable:$true] %s352
          %s354 = sshll.u32 %s346, 4
          %s355 = int_to_ptr.vmem [resolvable:$true] %s354
          %357 = dma.hbm_to_vmem [thread:$0]  %s353, 128, %s355, %s343
        $region32: #{tpu_custom_call.1} parent=15 // pred_fallthru
          _
        // Predicated region
        $region33: #{tpu_custom_call.1} parent=15 // pred_check
          %p358 = pneg %p151
        $region34: #{tpu_custom_call.1} parent=15 // pred_check_branch
          %360 = sbr.rel (%p358) target = $region36
        $region35: #{tpu_custom_call.1} parent=15 // pred_region
          %s361 = sand.u32 %s27, 1
          %s362 = scalar_lea.sflag [#allocation5], %s361
          %s363 = sand.u32 %s141, 1
          %s364 = smul.addr %s363, 8
          %s365 = scalar_lea.vmem [#allocation6], %s364
          %367 = vsyncadd %s362, 0
          %s368 = smul.addr %s27, 8
          %s369 = scalar_lea.hbm %s4, %s368
          %s371 = sshll.u32 %s369, 4
          %s372 = int_to_ptr.hbm [resolvable:$true] %s371
          %s373 = sshll.u32 %s365, 4
          %s374 = int_to_ptr.vmem [resolvable:$true] %s373
          %376 = dma.hbm_to_vmem [thread:$0]  %s372, 128, %s374, %s362
        $region36: #{tpu_custom_call.1} parent=15 // pred_fallthru
          _
        // Predicated region
        $region37: #{tpu_custom_call.1} parent=15 // pred_check
          %p377 = pneg %p177
        $region38: #{tpu_custom_call.1} parent=15 // pred_check_branch
          %379 = sbr.rel (%p377) target = $region40
        $region39: #{tpu_custom_call.1} parent=15 // pred_region
          %s380 = sand.u32 %s27, 1
          %s381 = scalar_lea.sflag [#allocation8], %s380
          %s382 = sand.u32 %s167, 1
          %s383 = smul.addr %s382, 8
          %s384 = scalar_lea.vmem [#allocation7], %s383
          %386 = vsyncadd %s381, 0
          %s387 = smul.addr %s27, 8
          %s388 = scalar_lea.hbm %s5, %s387
          %s390 = sshll.u32 %s388, 4
          %s391 = int_to_ptr.hbm [resolvable:$true] %s390
          %s392 = sshll.u32 %s384, 4
          %s393 = int_to_ptr.vmem [resolvable:$true] %s392
          %395 = dma.hbm_to_vmem [thread:$0]  %s391, 128, %s393, %s381
        $region40: #{tpu_custom_call.1} parent=15 // pred_fallthru
          _
        // Predicated region
        $region41: #{tpu_custom_call.1} parent=15 // pred_check
          %p396 = pneg %p203
        $region42: #{tpu_custom_call.1} parent=15 // pred_check_branch
          %398 = sbr.rel (%p396) target = $region44
        $region43: #{tpu_custom_call.1} parent=15 // pred_region
          %s399 = sand.u32 %s27, 1
          %s400 = scalar_lea.sflag [#allocation8], %s399
          %s401 = sand.u32 %s193, 1
          %s402 = smul.addr %s401, 8
          %s403 = scalar_lea.vmem [#allocation9], %s402
          %405 = vsyncadd %s400, 0
          %s406 = smul.addr %s27, 8
          %s407 = scalar_lea.hbm %s6, %s406
          %s409 = sshll.u32 %s407, 4
          %s410 = int_to_ptr.hbm [resolvable:$true] %s409
          %s411 = sshll.u32 %s403, 4
          %s412 = int_to_ptr.vmem [resolvable:$true] %s411
          %414 = dma.hbm_to_vmem [thread:$0]  %s410, 128, %s412, %s400
        $region44: #{tpu_custom_call.1} parent=15 // pred_fallthru
          _
        // Predicated region
        $region45: #{tpu_custom_call.1} parent=15 // pred_check
          %p415 = pneg %p229
        $region46: #{tpu_custom_call.1} parent=15 // pred_check_branch
          %417 = sbr.rel (%p415) target = $region48
        $region47: #{tpu_custom_call.1} parent=15 // pred_region
          %s418 = sand.u32 %s27, 1
          %s419 = scalar_lea.sflag [#allocation11], %s418
          %s420 = sand.u32 %s219, 1
          %s421 = smul.addr %s420, 8
          %s422 = scalar_lea.vmem [#allocation10], %s421
          %424 = vsyncadd %s419, 0
          %s425 = smul.addr %s27, 8
          %s426 = scalar_lea.hbm %s7, %s425
          %s428 = sshll.u32 %s426, 4
          %s429 = int_to_ptr.hbm [resolvable:$true] %s428
          %s430 = sshll.u32 %s422, 4
          %s431 = int_to_ptr.vmem [resolvable:$true] %s430
          %433 = dma.hbm_to_vmem [thread:$0]  %s429, 128, %s431, %s419
        $region48: #{tpu_custom_call.1} parent=15 // pred_fallthru
          _
        // Predicated region
        $region49: #{tpu_custom_call.1} parent=15 // pred_check
          %p434 = pneg %p255
        $region50: #{tpu_custom_call.1} parent=15 // pred_check_branch
          %436 = sbr.rel (%p434) target = $region52
        $region51: #{tpu_custom_call.1} parent=15 // pred_region
          %s437 = sand.u32 %s27, 1
          %s438 = scalar_lea.sflag [#allocation11], %s437
          %s439 = sand.u32 %s245, 1
          %s440 = smul.addr %s439, 8
          %s441 = scalar_lea.vmem [#allocation12], %s440
          %443 = vsyncadd %s438, 0
          %s444 = smul.addr %s27, 8
          %s445 = scalar_lea.hbm %s8, %s444
          %s447 = sshll.u32 %s445, 4
          %s448 = int_to_ptr.hbm [resolvable:$true] %s447
          %s449 = sshll.u32 %s441, 4
          %s450 = int_to_ptr.vmem [resolvable:$true] %s449
          %452 = dma.hbm_to_vmem [thread:$0]  %s448, 128, %s450, %s438
        $region52: #{tpu_custom_call.1} parent=15 // pred_fallthru
          _
      $region16: #{tpu_custom_call.1} parent=5 // pred_fallthru
        _
      %p453 = scmp.le.s32.totalorder 1, %s27
      %p454 = scmp.lt.s32.totalorder %s27, 3
      %p455 = pnand %p453, %p454
      %p456 = pneg %p455
      // Predicated region
      $region53: #{tpu_custom_call.1} parent=5 // pred_check
        _
      $region54: #{tpu_custom_call.1} parent=5 // pred_check_branch
        %458 = sbr.rel (%p455) target = $region56
      $region55: #{tpu_custom_call.1} parent=5 // pred_region
        %s459 = ssub.s32 %s27, 1
        %s460 = sand.u32 %s92, 1
        %s461 = scalar_lea.sflag [#allocation3], %s460
        %s462 = sand.u32 %s92, 1
        %s463 = smul.addr %s462, 8
        %s464 = scalar_lea.vmem [#allocation2], %s463
        // Predicated region
        $region57: #{tpu_custom_call.1} parent=55 // pred_check
          %p465 = pneg %p105
        $region58: #{tpu_custom_call.1} parent=55 // pred_check_branch
          %467 = sbr.rel (%p465) target = $region60
        $region59: #{tpu_custom_call.1} parent=55 // pred_region
          %469 = dma.done %s461, 128
        $region60: #{tpu_custom_call.1} parent=55 // pred_fallthru
          _
        %s470 = sand.u32 %s32, 1
        %s471 = scalar_lea.sflag [#allocation5], %s470
        %s472 = sand.u32 %s118, 1
        %s473 = smul.addr %s472, 8
        %s474 = scalar_lea.vmem [#allocation4], %s473
        // Predicated region
        $region61: #{tpu_custom_call.1} parent=55 // pred_check
          %p475 = pneg %p131
        $region62: #{tpu_custom_call.1} parent=55 // pred_check_branch
          %477 = sbr.rel (%p475) target = $region64
        $region63: #{tpu_custom_call.1} parent=55 // pred_region
          %479 = dma.done %s471, 128
        $region64: #{tpu_custom_call.1} parent=55 // pred_fallthru
          _
        %s480 = sand.u32 %s32, 1
        %s481 = scalar_lea.sflag [#allocation5], %s480
        %s482 = sand.u32 %s144, 1
        %s483 = smul.addr %s482, 8
        %s484 = scalar_lea.vmem [#allocation6], %s483
        // Predicated region
        $region65: #{tpu_custom_call.1} parent=55 // pred_check
          %p485 = pneg %p157
        $region66: #{tpu_custom_call.1} parent=55 // pred_check_branch
          %487 = sbr.rel (%p485) target = $region68
        $region67: #{tpu_custom_call.1} parent=55 // pred_region
          %489 = dma.done %s481, 128
        $region68: #{tpu_custom_call.1} parent=55 // pred_fallthru
          _
        %s490 = sand.u32 %s32, 1
        %s491 = scalar_lea.sflag [#allocation8], %s490
        %s492 = sand.u32 %s170, 1
        %s493 = smul.addr %s492, 8
        %s494 = scalar_lea.vmem [#allocation7], %s493
        // Predicated region
        $region69: #{tpu_custom_call.1} parent=55 // pred_check
          %p495 = pneg %p183
        $region70: #{tpu_custom_call.1} parent=55 // pred_check_branch
          %497 = sbr.rel (%p495) target = $region72
        $region71: #{tpu_custom_call.1} parent=55 // pred_region
          %499 = dma.done %s491, 128
        $region72: #{tpu_custom_call.1} parent=55 // pred_fallthru
          _
        %s500 = sand.u32 %s32, 1
        %s501 = scalar_lea.sflag [#allocation8], %s500
        %s502 = sand.u32 %s196, 1
        %s503 = smul.addr %s502, 8
        %s504 = scalar_lea.vmem [#allocation9], %s503
        // Predicated region
        $region73: #{tpu_custom_call.1} parent=55 // pred_check
          %p505 = pneg %p209
        $region74: #{tpu_custom_call.1} parent=55 // pred_check_branch
          %507 = sbr.rel (%p505) target = $region76
        $region75: #{tpu_custom_call.1} parent=55 // pred_region
          %509 = dma.done %s501, 128
        $region76: #{tpu_custom_call.1} parent=55 // pred_fallthru
          _
        %s510 = sand.u32 %s32, 1
        %s511 = scalar_lea.sflag [#allocation11], %s510
        %s512 = sand.u32 %s222, 1
        %s513 = smul.addr %s512, 8
        %s514 = scalar_lea.vmem [#allocation10], %s513
        // Predicated region
        $region77: #{tpu_custom_call.1} parent=55 // pred_check
          %p515 = pneg %p235
        $region78: #{tpu_custom_call.1} parent=55 // pred_check_branch
          %517 = sbr.rel (%p515) target = $region80
        $region79: #{tpu_custom_call.1} parent=55 // pred_region
          %519 = dma.done %s511, 128
        $region80: #{tpu_custom_call.1} parent=55 // pred_fallthru
          _
        %s520 = sand.u32 %s32, 1
        %s521 = scalar_lea.sflag [#allocation11], %s520
        %s522 = sand.u32 %s248, 1
        %s523 = smul.addr %s522, 8
        %s524 = scalar_lea.vmem [#allocation12], %s523
        // Predicated region
        $region81: #{tpu_custom_call.1} parent=55 // pred_check
          %p525 = pneg %p261
        $region82: #{tpu_custom_call.1} parent=55 // pred_check_branch
          %527 = sbr.rel (%p525) target = $region84
        $region83: #{tpu_custom_call.1} parent=55 // pred_region
          %529 = dma.done %s521, 128
        $region84: #{tpu_custom_call.1} parent=55 // pred_fallthru
          _
        %p530 = scmp.lt.s32.totalorder %s32, 1
        %s531 = scalar_select %p530, %s32, 1
        %s532 = smul.addr %s531, 8
        %s533 = scalar_lea.vmem %s0, %s532
        %p534 = pneg %p53
        %p535 = pneg %p50
        %p536 = scmp.lt.s32.totalorder %s32, 1
        %s537 = scalar_select %p536, %s32, 1
        %s538 = smul.addr %s537, 8
        %s539 = scalar_lea.vmem %s1, %s538
        %p540 = pneg %p79
        %p541 = pneg %p76
        %s542 = sand.u32 %s92, 1
        %s543 = scalar_lea.sflag [#allocation3], %s542
        %s544 = sand.u32 %s92, 1
        %s545 = smul.addr %s544, 8
        %s546 = scalar_lea.vmem [#allocation2], %s545
        %p547 = pneg %p105
        %p548 = pneg %p102
        %s549 = sand.u32 %s32, 1
        %s550 = scalar_lea.sflag [#allocation5], %s549
        %s551 = sand.u32 %s118, 1
        %s552 = smul.addr %s551, 8
        %s553 = scalar_lea.vmem [#allocation4], %s552
        %p554 = pneg %p131
        %p555 = pneg %p128
        %s556 = sand.u32 %s32, 1
        %s557 = scalar_lea.sflag [#allocation5], %s556
        %s558 = sand.u32 %s144, 1
        %s559 = smul.addr %s558, 8
        %s560 = scalar_lea.vmem [#allocation6], %s559
        %p561 = pneg %p157
        %p562 = pneg %p154
        %s563 = sand.u32 %s32, 1
        %s564 = scalar_lea.sflag [#allocation8], %s563
        %s565 = sand.u32 %s170, 1
        %s566 = smul.addr %s565, 8
        %s567 = scalar_lea.vmem [#allocation7], %s566
        %p568 = pneg %p183
        %p569 = pneg %p180
        %s570 = sand.u32 %s32, 1
        %s571 = scalar_lea.sflag [#allocation8], %s570
        %s572 = sand.u32 %s196, 1
        %s573 = smul.addr %s572, 8
        %s574 = scalar_lea.vmem [#allocation9], %s573
        %p575 = pneg %p209
        %p576 = pneg %p206
        %s577 = sand.u32 %s32, 1
        %s578 = scalar_lea.sflag [#allocation11], %s577
        %s579 = sand.u32 %s222, 1
        %s580 = smul.addr %s579, 8
        %s581 = scalar_lea.vmem [#allocation10], %s580
        %p582 = pneg %p235
        %p583 = pneg %p232
        %s584 = sand.u32 %s32, 1
        %s585 = scalar_lea.sflag [#allocation11], %s584
        %s586 = sand.u32 %s248, 1
        %s587 = smul.addr %s586, 8
        %s588 = scalar_lea.vmem [#allocation12], %s587
        %p589 = pneg %p261
        %p590 = pneg %p258
        %p591 = pneg %p287
        %p592 = pneg %p284
        %p593 = scmp.lt.s32.totalorder %s32, 1
        %s594 = scalar_select %p593, %s32, 1
        %s595 = smul.addr %s594, 8
        %s596 = scalar_lea.vmem %s9, %s595
        %p597 = scmp.lt.s32.totalorder %s32, 1
        %s598 = scalar_select %p597, %s32, 1
        %s599 = smul.addr %s598, 8
        %s600 = scalar_lea.vmem %s0, %s599
        %p601 = scmp.lt.s32.totalorder %s32, 1
        %s602 = scalar_select %p601, %s32, 1
        %s603 = smul.addr %s602, 8
        %s604 = scalar_lea.vmem %s1, %s603
        %p605 = scmp.lt.s32.totalorder %s32, 1
        %s606 = scalar_select %p605, %s32, 1
        %s607 = smul.addr %s606, 8
        %s608 = scalar_lea.vmem %s9, %s607
        %v609 = vld [vmem:[%s600] sm:$0xff]
        %v610 = vlaneseq
        %v611 = vand.u32 %v610, 127
        %612 = vset.pattern.permute.xlu0 0
        %613 = vperm.xlu0 %612, %v609
        %v614 = vpop.permute.xlu0 %613
        %vm615 = vcmp.eq.s32.totalorder %v611, %v614
        %v616 = vld [vmem:[%s604] sm:$0xff]
        %v617 = vld [vmem:[%s464] sm:$0xff]
        %vm618 = vcmask 261120
        %v619 = vsel %vm618, %v616, -inf
        %620 = vmax.xlane.f32.xlu0 %v619
        %v621 = vpop.xlane.xlu0 %620
        %v622 = vsub.f32 %v616, %v621
        %v623 = vmul.f32 %v622, 1.442695
        %v624 = vpow.pop %v623
        %v625 = vsel %vm618, %v624, 0.0
        %626 = vadd.xlane.f32.xlu0 %v625
        %v627 = vpop.xlane.xlu0 %626
        %v628 = vlog2.pop %v627
        %v629 = vmul.f32 %v628, 0.6931472
        %v630 = vsub.f32 %v622, %v629
        %v631 = vrcp.pop %v627
        %v632 = vmul.f32 %v627, %v631
        %v633 = vsub.f32 1.0, %v632
        %v634 = vmul.f32 %v631, %v633
        %v635 = vadd.f32 %v631, %v634
        %vm636 = vweird.f32 %v627
        %vm637 = vweird.f32 %v631
        %vm638 = vmor %vm636, %vm637
        %v639 = vsel %vm638, %v631, %v635
        %v640 = vand.u32 2147483647, %v627
        %vm641 = vcmp.eq.f32.partialorder %v640, 8.507059e+37
        %v642 = vand.u32 %v627, 2147483648
        %v643 = vor.u32 1.1754944e-38, %v642
        %v644 = vsel %vm641, %v643, %v639
        %v645 = vmul.f32 %v624, %v644
        %v646 = vsel %vm618, %v617, -inf
        %647 = vmax.xlane.f32.xlu0 %v646
        %v648 = vpop.xlane.xlu0 %647
        %v649 = vsub.f32 %v617, %v648
        %v650 = vmul.f32 %v649, 1.442695
        %v651 = vpow.pop %v650
        %v652 = vsel %vm618, %v651, 0.0
        %653 = vadd.xlane.f32.xlu0 %v652
        %v654 = vpop.xlane.xlu0 %653
        %v655 = vlog2.pop %v654
        %v656 = vmul.f32 %v655, 0.6931472
        %v657 = vsub.f32 %v649, %v656
        %v658 = vrcp.pop %v654
        %v659 = vmul.f32 %v654, %v658
        %v660 = vsub.f32 1.0, %v659
        %v661 = vmul.f32 %v658, %v660
        %v662 = vadd.f32 %v658, %v661
        %vm663 = vweird.f32 %v654
        %vm664 = vweird.f32 %v658
        %vm665 = vmor %vm663, %vm664
        %v666 = vsel %vm665, %v658, %v662
        %v667 = vand.u32 2147483647, %v654
        %vm668 = vcmp.eq.f32.partialorder %v667, 8.507059e+37
        %v669 = vand.u32 %v654, 2147483648
        %v670 = vor.u32 1.1754944e-38, %v669
        %v671 = vsel %vm668, %v670, %v666
        %v672 = vmul.f32 %v651, %v671
        %v673 = vadd.f32 %v645, 1e-07
        %v674 = vlog2.pop %v673
        %v675 = vmul.f32 %v674, 0.6931472
        %v676 = vsub.f32 0.0, %v675
        %v677 = vadd.f32 %v672, 1e-07
        %v678 = vlog2.pop %v677
        %v679 = vmul.f32 %v678, 0.6931472
        %v680 = vsub.f32 0.0, %v679
        %v681 = vadd.f32 %v630, %v657
        %v682 = vsel %vm615, %v681, 0.0
        %v683 = vsel %vm618, %v682, 0.0
        %684 = vadd.xlane.f32.xlu0 %v683
        %v685 = vpop.xlane.xlu0 %684
        %v686 = vmul.f32 %v676, %v672
        %v687 = vsel %vm618, %v686, 0.0
        %688 = vadd.xlane.f32.xlu0 %v687
        %v689 = vpop.xlane.xlu0 %688
        %v690 = vmul.f32 %v680, %v645
        %v691 = vsel %vm618, %v690, 0.0
        %692 = vadd.xlane.f32.xlu0 %v691
        %v693 = vpop.xlane.xlu0 %692
        %v694 = vadd.f32 %v689, %v693
        %v695 = vmul.f32 %v676, %v645
        %v696 = vsel %vm618, %v695, 0.0
        %697 = vadd.xlane.f32.xlu0 %v696
        %v698 = vpop.xlane.xlu0 %697
        %v699 = vmul.f32 %v680, %v672
        %v700 = vsel %vm618, %v699, 0.0
        %701 = vadd.xlane.f32.xlu0 %v700
        %v702 = vpop.xlane.xlu0 %701
        %v703 = vadd.f32 %v698, %v702
        %v704 = vmul.f32 %v685, -0.9
        %v705 = vmul.f32 %v694, 0.1
        %v706 = vadd.f32 %v704, %v705
        %v707 = vadd.f32 %v706, 0.0
        %v708 = vadd.f32 %v703, 0.0
        %v709 = vld [vmem:[%s474] sm:$0xff]
        %v710 = vld [vmem:[%s484] sm:$0xff]
        %v711 = vsel %vm618, %v709, -inf
        %712 = vmax.xlane.f32.xlu0 %v711
        %v713 = vpop.xlane.xlu0 %712
        %v714 = vsub.f32 %v709, %v713
        %v715 = vmul.f32 %v714, 1.442695
        %v716 = vpow.pop %v715
        %v717 = vsel %vm618, %v716, 0.0
        %718 = vadd.xlane.f32.xlu0 %v717
        %v719 = vpop.xlane.xlu0 %718
        %v720 = vlog2.pop %v719
        %v721 = vmul.f32 %v720, 0.6931472
        %v722 = vsub.f32 %v714, %v721
        %v723 = vrcp.pop %v719
        %v724 = vmul.f32 %v719, %v723
        %v725 = vsub.f32 1.0, %v724
        %v726 = vmul.f32 %v723, %v725
        %v727 = vadd.f32 %v723, %v726
        %vm728 = vweird.f32 %v719
        %vm729 = vweird.f32 %v723
        %vm730 = vmor %vm728, %vm729
        %v731 = vsel %vm730, %v723, %v727
        %v732 = vand.u32 2147483647, %v719
        %vm733 = vcmp.eq.f32.partialorder %v732, 8.507059e+37
        %v734 = vand.u32 %v719, 2147483648
        %v735 = vor.u32 1.1754944e-38, %v734
        %v736 = vsel %vm733, %v735, %v731
        %v737 = vmul.f32 %v716, %v736
        %v738 = vsel %vm618, %v710, -inf
        %739 = vmax.xlane.f32.xlu0 %v738
        %v740 = vpop.xlane.xlu0 %739
        %v741 = vsub.f32 %v710, %v740
        %v742 = vmul.f32 %v741, 1.442695
        %v743 = vpow.pop %v742
        %v744 = vsel %vm618, %v743, 0.0
        %745 = vadd.xlane.f32.xlu0 %v744
        %v746 = vpop.xlane.xlu0 %745
        %v747 = vlog2.pop %v746
        %v748 = vmul.f32 %v747, 0.6931472
        %v749 = vsub.f32 %v741, %v748
        %v750 = vrcp.pop %v746
        %v751 = vmul.f32 %v746, %v750
        %v752 = vsub.f32 1.0, %v751
        %v753 = vmul.f32 %v750, %v752
        %v754 = vadd.f32 %v750, %v753
        %vm755 = vweird.f32 %v746
        %vm756 = vweird.f32 %v750
        %vm757 = vmor %vm755, %vm756
        %v758 = vsel %vm757, %v750, %v754
        %v759 = vand.u32 2147483647, %v746
        %vm760 = vcmp.eq.f32.partialorder %v759, 8.507059e+37
        %v761 = vand.u32 %v746, 2147483648
        %v762 = vor.u32 1.1754944e-38, %v761
        %v763 = vsel %vm760, %v762, %v758
        %v764 = vmul.f32 %v743, %v763
        %v765 = vadd.f32 %v737, 1e-07
        %v766 = vlog2.pop %v765
        %v767 = vmul.f32 %v766, 0.6931472
        %v768 = vsub.f32 0.0, %v767
        %v769 = vadd.f32 %v764, 1e-07
        %v770 = vlog2.pop %v769
        %v771 = vmul.f32 %v770, 0.6931472
        %v772 = vsub.f32 0.0, %v771
        %v773 = vadd.f32 %v722, %v749
        %v774 = vsel %vm615, %v773, 0.0
        %v775 = vsel %vm618, %v774, 0.0
        %776 = vadd.xlane.f32.xlu0 %v775
        %v777 = vpop.xlane.xlu0 %776
        %v778 = vmul.f32 %v768, %v764
        %v779 = vsel %vm618, %v778, 0.0
        %780 = vadd.xlane.f32.xlu0 %v779
        %v781 = vpop.xlane.xlu0 %780
        %v782 = vmul.f32 %v772, %v737
        %v783 = vsel %vm618, %v782, 0.0
        %784 = vadd.xlane.f32.xlu0 %v783
        %v785 = vpop.xlane.xlu0 %784
        %v786 = vadd.f32 %v781, %v785
        %v787 = vmul.f32 %v768, %v737
        %v788 = vsel %vm618, %v787, 0.0
        %789 = vadd.xlane.f32.xlu0 %v788
        %v790 = vpop.xlane.xlu0 %789
        %v791 = vmul.f32 %v772, %v764
        %v792 = vsel %vm618, %v791, 0.0
        %793 = vadd.xlane.f32.xlu0 %v792
        %v794 = vpop.xlane.xlu0 %793
        %v795 = vadd.f32 %v790, %v794
        %v796 = vmul.f32 %v777, -0.9
        %v797 = vmul.f32 %v786, 0.1
        %v798 = vadd.f32 %v796, %v797
        %v799 = vadd.f32 %v707, %v798
        %v800 = vadd.f32 %v708, %v795
        %v801 = vld [vmem:[%s494] sm:$0xff]
        %v802 = vld [vmem:[%s504] sm:$0xff]
        %v803 = vsel %vm618, %v801, -inf
        %804 = vmax.xlane.f32.xlu0 %v803
        %v805 = vpop.xlane.xlu0 %804
        %v806 = vsub.f32 %v801, %v805
        %v807 = vmul.f32 %v806, 1.442695
        %v808 = vpow.pop %v807
        %v809 = vsel %vm618, %v808, 0.0
        %810 = vadd.xlane.f32.xlu0 %v809
        %v811 = vpop.xlane.xlu0 %810
        %v812 = vlog2.pop %v811
        %v813 = vmul.f32 %v812, 0.6931472
        %v814 = vsub.f32 %v806, %v813
        %v815 = vrcp.pop %v811
        %v816 = vmul.f32 %v811, %v815
        %v817 = vsub.f32 1.0, %v816
        %v818 = vmul.f32 %v815, %v817
        %v819 = vadd.f32 %v815, %v818
        %vm820 = vweird.f32 %v811
        %vm821 = vweird.f32 %v815
        %vm822 = vmor %vm820, %vm821
        %v823 = vsel %vm822, %v815, %v819
        %v824 = vand.u32 2147483647, %v811
        %vm825 = vcmp.eq.f32.partialorder %v824, 8.507059e+37
        %v826 = vand.u32 %v811, 2147483648
        %v827 = vor.u32 1.1754944e-38, %v826
        %v828 = vsel %vm825, %v827, %v823
        %v829 = vmul.f32 %v808, %v828
        %v830 = vsel %vm618, %v802, -inf
        %831 = vmax.xlane.f32.xlu0 %v830
        %v832 = vpop.xlane.xlu0 %831
        %v833 = vsub.f32 %v802, %v832
        %v834 = vmul.f32 %v833, 1.442695
        %v835 = vpow.pop %v834
        %v836 = vsel %vm618, %v835, 0.0
        %837 = vadd.xlane.f32.xlu0 %v836
        %v838 = vpop.xlane.xlu0 %837
        %v839 = vlog2.pop %v838
        %v840 = vmul.f32 %v839, 0.6931472
        %v841 = vsub.f32 %v833, %v840
        %v842 = vrcp.pop %v838
        %v843 = vmul.f32 %v838, %v842
        %v844 = vsub.f32 1.0, %v843
        %v845 = vmul.f32 %v842, %v844
        %v846 = vadd.f32 %v842, %v845
        %vm847 = vweird.f32 %v838
        %vm848 = vweird.f32 %v842
        %vm849 = vmor %vm847, %vm848
        %v850 = vsel %vm849, %v842, %v846
        %v851 = vand.u32 2147483647, %v838
        %vm852 = vcmp.eq.f32.partialorder %v851, 8.507059e+37
        %v853 = vand.u32 %v838, 2147483648
        %v854 = vor.u32 1.1754944e-38, %v853
        %v855 = vsel %vm852, %v854, %v850
        %v856 = vmul.f32 %v835, %v855
        %v857 = vadd.f32 %v829, 1e-07
        %v858 = vlog2.pop %v857
        %v859 = vmul.f32 %v858, 0.6931472
        %v860 = vsub.f32 0.0, %v859
        %v861 = vadd.f32 %v856, 1e-07
        %v862 = vlog2.pop %v861
        %v863 = vmul.f32 %v862, 0.6931472
        %v864 = vsub.f32 0.0, %v863
        %v865 = vadd.f32 %v814, %v841
        %v866 = vsel %vm615, %v865, 0.0
        %v867 = vsel %vm618, %v866, 0.0
        %868 = vadd.xlane.f32.xlu0 %v867
        %v869 = vpop.xlane.xlu0 %868
        %v870 = vmul.f32 %v860, %v856
        %v871 = vsel %vm618, %v870, 0.0
        %872 = vadd.xlane.f32.xlu0 %v871
        %v873 = vpop.xlane.xlu0 %872
        %v874 = vmul.f32 %v864, %v829
        %v875 = vsel %vm618, %v874, 0.0
        %876 = vadd.xlane.f32.xlu0 %v875
        %v877 = vpop.xlane.xlu0 %876
        %v878 = vadd.f32 %v873, %v877
        %v879 = vmul.f32 %v860, %v829
        %v880 = vsel %vm618, %v879, 0.0
        %881 = vadd.xlane.f32.xlu0 %v880
        %v882 = vpop.xlane.xlu0 %881
        %v883 = vmul.f32 %v864, %v856
        %v884 = vsel %vm618, %v883, 0.0
        %885 = vadd.xlane.f32.xlu0 %v884
        %v886 = vpop.xlane.xlu0 %885
        %v887 = vadd.f32 %v882, %v886
        %v888 = vmul.f32 %v869, -0.9
        %v889 = vmul.f32 %v878, 0.1
        %v890 = vadd.f32 %v888, %v889
        %v891 = vadd.f32 %v799, %v890
        %v892 = vadd.f32 %v800, %v887
        %v893 = vld [vmem:[%s514] sm:$0xff]
        %v894 = vld [vmem:[%s524] sm:$0xff]
        %v895 = vsel %vm618, %v893, -inf
        %896 = vmax.xlane.f32.xlu0 %v895
        %v897 = vpop.xlane.xlu0 %896
        %v898 = vsub.f32 %v893, %v897
        %v899 = vmul.f32 %v898, 1.442695
        %v900 = vpow.pop %v899
        %v901 = vsel %vm618, %v900, 0.0
        %902 = vadd.xlane.f32.xlu0 %v901
        %v903 = vpop.xlane.xlu0 %902
        %v904 = vlog2.pop %v903
        %v905 = vmul.f32 %v904, 0.6931472
        %v906 = vsub.f32 %v898, %v905
        %v907 = vrcp.pop %v903
        %v908 = vmul.f32 %v903, %v907
        %v909 = vsub.f32 1.0, %v908
        %v910 = vmul.f32 %v907, %v909
        %v911 = vadd.f32 %v907, %v910
        %vm912 = vweird.f32 %v903
        %vm913 = vweird.f32 %v907
        %vm914 = vmor %vm912, %vm913
        %v915 = vsel %vm914, %v907, %v911
        %v916 = vand.u32 2147483647, %v903
        %vm917 = vcmp.eq.f32.partialorder %v916, 8.507059e+37
        %v918 = vand.u32 %v903, 2147483648
        %v919 = vor.u32 1.1754944e-38, %v918
        %v920 = vsel %vm917, %v919, %v915
        %v921 = vmul.f32 %v900, %v920
        %v922 = vsel %vm618, %v894, -inf
        %923 = vmax.xlane.f32.xlu0 %v922
        %v924 = vpop.xlane.xlu0 %923
        %v925 = vsub.f32 %v894, %v924
        %v926 = vmul.f32 %v925, 1.442695
        %v927 = vpow.pop %v926
        %v928 = vsel %vm618, %v927, 0.0
        %929 = vadd.xlane.f32.xlu0 %v928
        %v930 = vpop.xlane.xlu0 %929
        %v931 = vlog2.pop %v930
        %v932 = vmul.f32 %v931, 0.6931472
        %v933 = vsub.f32 %v925, %v932
        %v934 = vrcp.pop %v930
        %v935 = vmul.f32 %v930, %v934
        %v936 = vsub.f32 1.0, %v935
        %v937 = vmul.f32 %v934, %v936
        %v938 = vadd.f32 %v934, %v937
        %vm939 = vweird.f32 %v930
        %vm940 = vweird.f32 %v934
        %vm941 = vmor %vm939, %vm940
        %v942 = vsel %vm941, %v934, %v938
        %v943 = vand.u32 2147483647, %v930
        %vm944 = vcmp.eq.f32.partialorder %v943, 8.507059e+37
        %v945 = vand.u32 %v930, 2147483648
        %v946 = vor.u32 1.1754944e-38, %v945
        %v947 = vsel %vm944, %v946, %v942
        %v948 = vmul.f32 %v927, %v947
        %v949 = vadd.f32 %v921, 1e-07
        %v950 = vlog2.pop %v949
        %v951 = vmul.f32 %v950, 0.6931472
        %v952 = vsub.f32 0.0, %v951
        %v953 = vadd.f32 %v948, 1e-07
        %v954 = vlog2.pop %v953
        %v955 = vmul.f32 %v954, 0.6931472
        %v956 = vsub.f32 0.0, %v955
        %v957 = vadd.f32 %v906, %v933
        %v958 = vsel %vm615, %v957, 0.0
        %v959 = vsel %vm618, %v958, 0.0
        %960 = vadd.xlane.f32.xlu0 %v959
        %v961 = vpop.xlane.xlu0 %960
        %v962 = vmul.f32 %v952, %v948
        %v963 = vsel %vm618, %v962, 0.0
        %964 = vadd.xlane.f32.xlu0 %v963
        %v965 = vpop.xlane.xlu0 %964
        %v966 = vmul.f32 %v956, %v921
        %v967 = vsel %vm618, %v966, 0.0
        %968 = vadd.xlane.f32.xlu0 %v967
        %v969 = vpop.xlane.xlu0 %968
        %v970 = vadd.f32 %v965, %v969
        %v971 = vmul.f32 %v952, %v921
        %v972 = vsel %vm618, %v971, 0.0
        %973 = vadd.xlane.f32.xlu0 %v972
        %v974 = vpop.xlane.xlu0 %973
        %v975 = vmul.f32 %v956, %v948
        %v976 = vsel %vm618, %v975, 0.0
        %977 = vadd.xlane.f32.xlu0 %v976
        %v978 = vpop.xlane.xlu0 %977
        %v979 = vadd.f32 %v974, %v978
        %v980 = vmul.f32 %v961, -1.8
        %v981 = vmul.f32 %v970, 0.2
        %v982 = vadd.f32 %v980, %v981
        %v983 = vadd.f32 %v891, %v982
        %v984 = vmul.f32 %v979, 2.0
        %v985 = vadd.f32 %v892, %v984
        %vm986 = vcmask 7168
        %v987 = vsel %vm986, %v983, %v985
        %vm988 = vcmask 15360
        %989 = vst.msk [vmem:[%s608] sm:$0xff] %vm988, %v987
        %p990 = scmp.lt.s32.totalorder %s32, 1
        %s991 = scalar_select %p990, %s32, 1
        %s992 = smul.addr %s991, 8
        %s993 = scalar_lea.vmem %s9, %s992
        // Predicated region
        $region85: #{tpu_custom_call.1} parent=55 // pred_check
          %p994 = pneg %p284
        $region86: #{tpu_custom_call.1} parent=55 // pred_check_branch
          %996 = sbr.rel (%p994) target = $region88
        $region87: #{tpu_custom_call.1} parent=55 // pred_region
          _
        $region88: #{tpu_custom_call.1} parent=55 // pred_fallthru
          _
      $region56: #{tpu_custom_call.1} parent=5 // pred_fallthru
        _
      %p997 = scmp.le.s32.totalorder 2, %s27
      // Predicated region
      $region89: #{tpu_custom_call.1} parent=5 // pred_check
        %p998 = pneg %p997
      $region90: #{tpu_custom_call.1} parent=5 // pred_check_branch
        %1000 = sbr.rel (%p998) target = $region92
      $region91: #{tpu_custom_call.1} parent=5 // pred_region
        %s1001 = ssub.s32 %s27, 2
        // Predicated region
        $region93: #{tpu_custom_call.1} parent=91 // pred_check
          %p1002 = pneg %p290
        $region94: #{tpu_custom_call.1} parent=91 // pred_check_branch
          %1004 = sbr.rel (%p1002) target = $region96
        $region95: #{tpu_custom_call.1} parent=91 // pred_region
          %p1005 = scmp.lt.s32.totalorder %s33, 1
          %s1006 = scalar_select %p1005, %s33, 1
          %s1007 = smul.addr %s1006, 8
          %s1008 = scalar_lea.vmem %s9, %s1007
        $region96: #{tpu_custom_call.1} parent=91 // pred_fallthru
          _
      $region92: #{tpu_custom_call.1} parent=5 // pred_fallthru
        _
    $region6: #{tpu_custom_call.1} parent=1 // loop_footer
      %s31 = sadd.s32 1, %s27
    $region7: #{tpu_custom_call.1} parent=1 // loop_footer_branch
      %26 = sbr.rel target = $region3
    $region8: #{tpu_custom_call.1} parent=1 // loop_exit
      _
    %1009 = vsyncpa [#allocation3], 1
    %s1010 = scalar_lea.sflag [#allocation3], 1
    %1011 = vsyncpa %s1010, 1
    %1012 = vsyncpa [#allocation5], 1
    %s1013 = scalar_lea.sflag [#allocation5], 1
    %1014 = vsyncpa %s1013, 1
    %1015 = vsyncpa [#allocation8], 1
    %s1016 = scalar_lea.sflag [#allocation8], 1
    %1017 = vsyncpa %s1016, 1
    %1018 = vsyncpa [#allocation11], 1
    %s1019 = scalar_lea.sflag [#allocation11], 1
    %1020 = vsyncpa %s1019, 1

</llo_original>
